<compile_context>
chip_gen: v5e
topology: v5e:2x2
jax: 0.10.0
libtpu: 0.0.40
codegen_flags: <defaults>
</compile_context>

<pallas_src>
import math

import jax
import jax.numpy as jnp
import numpy as np
from jax.experimental import pallas as pl
from jax.experimental.pallas import tpu as pltpu


# ----------------------------- Pallas kernel --------------------------------
def _make_s2s_lstm_kernel(T, B, H, Din, Dout):
    """Builds the kernel with static T/B/H/Din/Dout closed over (loops unrolled)."""
    G = 4 * H  # fused gate width (i|f|g|o)

    def kernel(x_ref,            # (B, T*Din)     encoder input, batch-major, flattened
               w_ih_e_big_ref,   # (T*Din, T*4H)  block-diag encoder input->gates
               b_e_big_ref,      # (1, T*4H)      encoder bias, tiled per step
               w_hh_e_ref,       # (H, 4H)        encoder hidden->gates (fused)
               w_hh_d_ref,       # (H, 4H)        decoder hidden->gates (step 0 only)
               b_d_ref,          # (1, 4H)        decoder bias (step 0 only)
               w_hh_d_eff_ref,   # (H, 4H)        decoder effective hidden weights (fc folded in)
               b_d_eff_ref,      # (1, 4H)        decoder effective bias
               w_fc_big_ref,     # (T*H, T*Dout)  block-diag fc weight
               b_fc_big_ref,     # (1, T*Dout)    fc bias, tiled per step
               out_ref):         # (B, T*Dout)    decoder predictions, batch-major
        f32 = jnp.float32

        w_hh_e = w_hh_e_ref[...]
        w_hh_d = w_hh_d_ref[...]
        w_hh_d_eff = w_hh_d_eff_ref[...]

        def cell(gates, c):
            # gates: (B, 4H) in PyTorch gate order i, f, g, o (static lane slices).
            i = jax.nn.sigmoid(gates[:, 0 * H:1 * H])
            f = jax.nn.sigmoid(gates[:, 1 * H:2 * H])
            g = jnp.tanh(gates[:, 2 * H:3 * H])
            o = jax.nn.sigmoid(gates[:, 3 * H:4 * H])
            c_new = f * c + i * g
            h_new = o * jnp.tanh(c_new)
            return h_new, c_new

        # ---- Encoder: input projection hoisted out of the recurrence. ----
        # One (B, T*Din) x (T*Din, T*4H) block-diag matmul; bias folded in once.
        # Per-step gates are 128-lane-aligned static lane slices of x_proj.
        x_proj = (jnp.dot(x_ref[...], w_ih_e_big_ref[...],
                          preferred_element_type=f32) + b_e_big_ref[...])   # (B, T*4H)

        h = jnp.zeros((B, H), f32)
        c = jnp.zeros((B, H), f32)
        for t in range(T):  # fully unrolled: one fused MXU op per step
            gates = x_proj[:, t * G:(t + 1) * G] + jnp.dot(
                h, w_hh_e, preferred_element_type=f32)
            h, c = cell(gates, c)

        # ---- Decoder step 0: input is zeros(B, Dout) -> only hidden path + bias. ----
        b_d = jnp.broadcast_to(b_d_ref[...], (B, G))          # broadcast once
        gates = jnp.dot(h, w_hh_d, preferred_element_type=f32) + b_d
        h, c = cell(gates, c)
        hs = [h]

        # ---- Decoder steps 1..T-1: fc feedback folded into effective weights. ----
        b_d_eff = jnp.broadcast_to(b_d_eff_ref[...], (B, G))  # broadcast once
        for _ in range(1, T):  # fully unrolled: one fused MXU op per step
            gates = jnp.dot(h, w_hh_d_eff, preferred_element_type=f32) + b_d_eff
            h, c = cell(gates, c)
            hs.append(h)

        # ---- Batched fc projection + single lane-contiguous output store. ----
        h_lanes = jnp.concatenate(hs, axis=1)                  # (B, T*H)
        preds = (jnp.dot(h_lanes, w_fc_big_ref[...],
                         preferred_element_type=f32) + b_fc_big_ref[...])   # (B, T*Dout)
        out_ref[...] = preds.astype(out_ref.dtype)

    return kernel


# ------------------------------- wrapper -------------------------------------
def s2s_lstm_pallas(x, kp):
    """x: (B, T, D_in) float32 (batch_first, like PyTorch). Returns (B, T, D_out)."""
    B, T, Din = x.shape
    H = kp["w_hh_e"].shape[0]
    Dout = kp["w_fc_big"].shape[1] // T

    # Batch-major flatten only -- no transposes anywhere in the wrapper.
    x_bm = x.reshape(B, T * Din)

    args = (x_bm,
            kp["w_ih_e_big"], kp["b_e_big"], kp["w_hh_e"],
            kp["w_hh_d"], kp["b_d"], kp["w_hh_d_eff"], kp["b_d_eff"],
            kp["w_fc_big"], kp["b_fc_big"])

    # True algorithmic flops (not counting block-diag zero padding).
    flops = 2 * T * B * (Din * 4 * H + 2 * H * 4 * H + H * Dout)
    transcendentals = 2 * T * B * 5 * H            # 3 sigmoid + 2 tanh per cell step
    bytes_accessed = 4 * (sum(int(a.size) for a in args) + B * T * Dout)

    vmem = pl.BlockSpec(memory_space=pltpu.MemorySpace.VMEM)
    out_bm = pl.pallas_call(
        _make_s2s_lstm_kernel(T, B, H, Din, Dout),
        out_shape=jax.ShapeDtypeStruct((B, T * Dout), jnp.float32),
        in_specs=[vmem] * len(args),
        out_specs=vmem,
        compiler_params=pltpu.CompilerParams(vmem_limit_bytes=8 * 1024 * 1024),
        cost_estimate=pl.CostEstimate(flops=flops,
                                      transcendentals=transcendentals,
                                      bytes_accessed=bytes_accessed),
    )(*args)

    return out_bm.reshape(B, T, Dout)


# -------------------------- parameter construction ---------------------------
def _block_diag_tile(w, T):
    """(a, b) -> (T*a, T*b) block-diagonal with T copies of w on the diagonal."""
    return jnp.kron(jnp.eye(T, dtype=w.dtype), w)


def make_params(key, seq_len, input_dim, hidden_dim, output_dim):
    """PyTorch-style uniform(-1/sqrt(H), 1/sqrt(H)) init for LSTM + Linear."""
    stdv = 1.0 / math.sqrt(hidden_dim)
    ks = jax.random.split(key, 10)
    u = lambda k, shape: jax.random.uniform(k, shape, jnp.float32, -stdv, stdv)

    pt = {
        # encoder LSTM (input_dim -> hidden_dim)
        "w_ih_e": u(ks[0], (4 * hidden_dim, input_dim)),
        "w_hh_e": u(ks[1], (4 * hidden_dim, hidden_dim)),
        "b_ih_e": u(ks[2], (4 * hidden_dim,)),
        "b_hh_e": u(ks[3], (4 * hidden_dim,)),
        # decoder LSTM (output_dim -> hidden_dim)
        "w_ih_d": u(ks[4], (4 * hidden_dim, output_dim)),
        "w_hh_d": u(ks[5], (4 * hidden_dim, hidden_dim)),
        "b_ih_d": u(ks[6], (4 * hidden_dim,)),
        "b_hh_d": u(ks[7], (4 * hidden_dim,)),
        # fc: Linear(hidden_dim, output_dim)
        "w_fc": u(ks[8], (output_dim, hidden_dim)),
        "b_fc": u(ks[9], (output_dim,)),
    }

    # Fused kernel layout: weights as (in_dim, 4H) with gate blocks i|f|g|o along
    # columns (plain transpose of PyTorch's (4H, in_dim)); biases as (1, 4H).
    w_ih_e = pt["w_ih_e"].T                                     # (Din, 4H)
    w_hh_e = pt["w_hh_e"].T                                     # (H,   4H)
    b_e = (pt["b_ih_e"] + pt["b_hh_e"])[None, :]                # (1,   4H)

    w_ih_d = pt["w_ih_d"].T                                     # (Dout, 4H)
    w_hh_d = pt["w_hh_d"].T                                     # (H,    4H)
    b_d = (pt["b_ih_d"] + pt["b_hh_d"])[None, :]                # (1,    4H)

    w_fc_t = pt["w_fc"].T                                       # (H, Dout)
    b_fc_row = pt["b_fc"][None, :]                              # (1, Dout)

    # Fold the fc feedback (dec_in_{t+1} = h_t @ w_fc + b_fc) into the decoder
    # hidden weights: valid for every decoder step except step 0 (zero input).
    w_hh_d_eff = w_hh_d + w_fc_t @ w_ih_d                       # (H, 4H)
    b_d_eff = b_d + b_fc_row @ w_ih_d                           # (1, 4H)

    # Block-diagonal / tiled variants: keep x batch-major and make the output a
    # single lane-contiguous (B, T*Dout) store.  Off-diagonal zeros contribute
    # exact 0.0 terms, so numerics match the per-step formulation bit-for-bit.
    kp = {
        "w_ih_e_big": _block_diag_tile(w_ih_e, seq_len),        # (T*Din, T*4H)
        "b_e_big": jnp.tile(b_e, (1, seq_len)),                 # (1, T*4H)
        "w_hh_e": w_hh_e,
        "w_hh_d": w_hh_d, "b_d": b_d,
        "w_hh_d_eff": w_hh_d_eff, "b_d_eff": b_d_eff,
        "w_fc_big": _block_diag_tile(w_fc_t, seq_len),          # (T*H, T*Dout)
        "b_fc_big": jnp.tile(b_fc_row, (1, seq_len)),           # (1, T*Dout)
    }
    return pt, kp


# ---------------------------- pure-JAX reference -----------------------------
def _lstm_cell_ref(x_t, h, c, w_ih, w_hh, b_ih, b_hh):
    gates = x_t @ w_ih.T + h @ w_hh.T + b_ih + b_hh
    i, f, g, o = jnp.split(gates, 4, axis=-1)
    c = jax.nn.sigmoid(f) * c + jax.nn.sigmoid(i) * jnp.tanh(g)
    h = jax.nn.sigmoid(o) * jnp.tanh(c)
    return h, c


def s2s_lstm_ref(x, pt, hidden_dim, output_dim):
    B, T, _ = x.shape
    h = jnp.zeros((B, hidden_dim), jnp.float32)
    c = jnp.zeros((B, hidden_dim), jnp.float32)
    # encoder
    for t in range(T):
        h, c = _lstm_cell_ref(x[:, t, :], h, c,
                              pt["w_ih_e"], pt["w_hh_e"], pt["b_ih_e"], pt["b_hh_e"])
    # decoder (torch.zeros(B, 1, 1) first input -> requires output_dim == 1)
    dec_in = jnp.zeros((B, output_dim), jnp.float32)
    outs = []
    for _ in range(T):
        h, c = _lstm_cell_ref(dec_in, h, c,
                              pt["w_ih_d"], pt["w_hh_d"], pt["b_ih_d"], pt["b_hh_d"])
        pred = h @ pt["w_fc"].T + pt["b_fc"]
        outs.append(pred[:, None, :])
        dec_in = pred
    return jnp.concatenate(outs, axis=1)


# --------------------------------- main --------------------------------------
if __name__ == "__main__":
    # Small shapes consistent with the module's forward:
    # output_dim must be 1 (decoder seed is torch.zeros(B, 1, 1)).
    B, T, INPUT_DIM, HIDDEN_DIM, OUTPUT_DIM = 2, 8, 4, 32, 1

    root = jax.random.PRNGKey(0)
    k_params, k_x = jax.random.split(root)
    pt_params, kernel_params = make_params(k_params, T, INPUT_DIM, HIDDEN_DIM, OUTPUT_DIM)
    x = jax.random.normal(k_x, (B, T, INPUT_DIM), jnp.float32)

    out = s2s_lstm_pallas(x, kernel_params)
    out = jax.block_until_ready(out)

    ref = s2s_lstm_ref(x, pt_params, HIDDEN_DIM, OUTPUT_DIM)
    np.testing.assert_allclose(np.asarray(out), np.asarray(ref),
                               rtol=1e-4, atol=2e-5)

    assert out.shape == (B, T, OUTPUT_DIM)
    print("KERNEL_OK")
</pallas_src>

<mosaic_0001>
module attributes {stable_mosaic.version = 11 : i64} {
  func.func @kernel(%arg0: memref<2x32xf32, #tpu.memory_space<vmem>>, %arg1: memref<32x1024xf32, #tpu.memory_space<vmem>>, %arg2: memref<1x1024xf32, #tpu.memory_space<vmem>>, %arg3: memref<32x128xf32, #tpu.memory_space<vmem>>, %arg4: memref<32x128xf32, #tpu.memory_space<vmem>>, %arg5: memref<1x128xf32, #tpu.memory_space<vmem>>, %arg6: memref<32x128xf32, #tpu.memory_space<vmem>>, %arg7: memref<1x128xf32, #tpu.memory_space<vmem>>, %arg8: memref<256x8xf32, #tpu.memory_space<vmem>>, %arg9: memref<1x8xf32, #tpu.memory_space<vmem>>, %arg10: memref<2x8xf32, #tpu.memory_space<vmem>>) attributes {dimension_semantics = [], scalar_prefetch = 0 : i64, scratch_operands = 0 : i64, tpu.core_type = #tpu.core_type<tc>} {
    %c0 = arith.constant 0 : index
    %c0_0 = arith.constant 0 : index
    %0 = vector.load %arg3[%c0, %c0_0] : memref<32x128xf32, #tpu.memory_space<vmem>>, vector<32x128xf32>
    %c0_1 = arith.constant 0 : index
    %c0_2 = arith.constant 0 : index
    %1 = vector.load %arg4[%c0_1, %c0_2] : memref<32x128xf32, #tpu.memory_space<vmem>>, vector<32x128xf32>
    %c0_3 = arith.constant 0 : index
    %c0_4 = arith.constant 0 : index
    %2 = vector.load %arg6[%c0_3, %c0_4] : memref<32x128xf32, #tpu.memory_space<vmem>>, vector<32x128xf32>
    %c0_5 = arith.constant 0 : index
    %c0_6 = arith.constant 0 : index
    %3 = vector.load %arg0[%c0_5, %c0_6] : memref<2x32xf32, #tpu.memory_space<vmem>>, vector<2x32xf32>
    %c0_7 = arith.constant 0 : index
    %c0_8 = arith.constant 0 : index
    %4 = vector.load %arg1[%c0_7, %c0_8] : memref<32x1024xf32, #tpu.memory_space<vmem>>, vector<32x1024xf32>
    %cst = arith.constant dense<0.000000e+00> : vector<2x1024xf32>
    %5 = tpu.matmul %3, %4, %cst {dimension_numbers = #tpu.dot_dimension_numbers<[1], [0], [0], [1], [0, 0, 1, 1], [], []>} : vector<2x32xf32>, vector<32x1024xf32>, vector<2x1024xf32> -> vector<2x1024xf32>
    %c0_9 = arith.constant 0 : index
    %c0_10 = arith.constant 0 : index
    %6 = vector.load %arg2[%c0_9, %c0_10] : memref<1x1024xf32, #tpu.memory_space<vmem>>, vector<1x1024xf32>
    %7 = vector.broadcast %6 : vector<1x1024xf32> to vector<2x1024xf32>
    %8 = arith.addf %5, %7 : vector<2x1024xf32>
    %cst_11 = arith.constant 0.000000e+00 : f32
    %9 = vector.broadcast %cst_11 : f32 to vector<2x32xf32>
    %cst_12 = arith.constant 0.000000e+00 : f32
    %10 = vector.broadcast %cst_12 : f32 to vector<2x32xf32>
    %11 = vector.extract_strided_slice %8 {offsets = [0, 0], sizes = [2, 128], strides = [1, 1]} : vector<2x1024xf32> to vector<2x128xf32>
    %cst_13 = arith.constant dense<0.000000e+00> : vector<2x128xf32>
    %12 = tpu.matmul %9, %0, %cst_13 {dimension_numbers = #tpu.dot_dimension_numbers<[1], [0], [0], [1], [0, 0, 1, 1], [], []>} : vector<2x32xf32>, vector<32x128xf32>, vector<2x128xf32> -> vector<2x128xf32>
    %13 = arith.addf %11, %12 : vector<2x128xf32>
    %14 = vector.extract_strided_slice %13 {offsets = [0, 0], sizes = [2, 32], strides = [1, 1]} : vector<2x128xf32> to vector<2x32xf32>
    %15 = arith.negf %14 : vector<2x32xf32>
    %16 = math.exp %15 : vector<2x32xf32>
    %cst_14 = arith.constant 1.000000e+00 : f32
    %17 = vector.broadcast %cst_14 : f32 to vector<2x32xf32>
    %18 = arith.addf %17, %16 : vector<2x32xf32>
    %19 = arith.divf %17, %18 : vector<2x32xf32>
    %20 = vector.extract_strided_slice %13 {offsets = [0, 32], sizes = [2, 32], strides = [1, 1]} : vector<2x128xf32> to vector<2x32xf32>
    %21 = arith.negf %20 : vector<2x32xf32>
    %22 = math.exp %21 : vector<2x32xf32>
    %cst_15 = arith.constant 1.000000e+00 : f32
    %23 = vector.broadcast %cst_15 : f32 to vector<2x32xf32>
    %24 = arith.addf %23, %22 : vector<2x32xf32>
    %25 = arith.divf %23, %24 : vector<2x32xf32>
    %26 = vector.extract_strided_slice %13 {offsets = [0, 64], sizes = [2, 32], strides = [1, 1]} : vector<2x128xf32> to vector<2x32xf32>
    %27 = math.tanh %26 : vector<2x32xf32>
    %28 = vector.extract_strided_slice %13 {offsets = [0, 96], sizes = [2, 32], strides = [1, 1]} : vector<2x128xf32> to vector<2x32xf32>
    %29 = arith.negf %28 : vector<2x32xf32>
    %30 = math.exp %29 : vector<2x32xf32>
    %cst_16 = arith.constant 1.000000e+00 : f32
    %31 = vector.broadcast %cst_16 : f32 to vector<2x32xf32>
    %32 = arith.addf %31, %30 : vector<2x32xf32>
    %33 = arith.divf %31, %32 : vector<2x32xf32>
    %34 = arith.mulf %25, %10 : vector<2x32xf32>
    %35 = arith.mulf %19, %27 : vector<2x32xf32>
    %36 = arith.addf %34, %35 : vector<2x32xf32>
    %37 = math.tanh %36 : vector<2x32xf32>
    %38 = arith.mulf %33, %37 : vector<2x32xf32>
    %39 = vector.extract_strided_slice %8 {offsets = [0, 128], sizes = [2, 128], strides = [1, 1]} : vector<2x1024xf32> to vector<2x128xf32>
    %cst_17 = arith.constant dense<0.000000e+00> : vector<2x128xf32>
    %40 = tpu.matmul %38, %0, %cst_17 {dimension_numbers = #tpu.dot_dimension_numbers<[1], [0], [0], [1], [0, 0, 1, 1], [], []>} : vector<2x32xf32>, vector<32x128xf32>, vector<2x128xf32> -> vector<2x128xf32>
    %41 = arith.addf %39, %40 : vector<2x128xf32>
    %42 = vector.extract_strided_slice %41 {offsets = [0, 0], sizes = [2, 32], strides = [1, 1]} : vector<2x128xf32> to vector<2x32xf32>
    %43 = arith.negf %42 : vector<2x32xf32>
    %44 = math.exp %43 : vector<2x32xf32>
    %cst_18 = arith.constant 1.000000e+00 : f32
    %45 = vector.broadcast %cst_18 : f32 to vector<2x32xf32>
    %46 = arith.addf %45, %44 : vector<2x32xf32>
    %47 = arith.divf %45, %46 : vector<2x32xf32>
    %48 = vector.extract_strided_slice %41 {offsets = [0, 32], sizes = [2, 32], strides = [1, 1]} : vector<2x128xf32> to vector<2x32xf32>
    %49 = arith.negf %48 : vector<2x32xf32>
    %50 = math.exp %49 : vector<2x32xf32>
    %cst_19 = arith.constant 1.000000e+00 : f32
    %51 = vector.broadcast %cst_19 : f32 to vector<2x32xf32>
    %52 = arith.addf %51, %50 : vector<2x32xf32>
    %53 = arith.divf %51, %52 : vector<2x32xf32>
    %54 = vector.extract_strided_slice %41 {offsets = [0, 64], sizes = [2, 32], strides = [1, 1]} : vector<2x128xf32> to vector<2x32xf32>
    %55 = math.tanh %54 : vector<2x32xf32>
    %56 = vector.extract_strided_slice %41 {offsets = [0, 96], sizes = [2, 32], strides = [1, 1]} : vector<2x128xf32> to vector<2x32xf32>
    %57 = arith.negf %56 : vector<2x32xf32>
    %58 = math.exp %57 : vector<2x32xf32>
    %cst_20 = arith.constant 1.000000e+00 : f32
    %59 = vector.broadcast %cst_20 : f32 to vector<2x32xf32>
    %60 = arith.addf %59, %58 : vector<2x32xf32>
    %61 = arith.divf %59, %60 : vector<2x32xf32>
    %62 = arith.mulf %53, %36 : vector<2x32xf32>
    %63 = arith.mulf %47, %55 : vector<2x32xf32>
    %64 = arith.addf %62, %63 : vector<2x32xf32>
    %65 = math.tanh %64 : vector<2x32xf32>
    %66 = arith.mulf %61, %65 : vector<2x32xf32>
    %67 = vector.extract_strided_slice %8 {offsets = [0, 256], sizes = [2, 128], strides = [1, 1]} : vector<2x1024xf32> to vector<2x128xf32>
    %cst_21 = arith.constant dense<0.000000e+00> : vector<2x128xf32>
    %68 = tpu.matmul %66, %0, %cst_21 {dimension_numbers = #tpu.dot_dimension_numbers<[1], [0], [0], [1], [0, 0, 1, 1], [], []>} : vector<2x32xf32>, vector<32x128xf32>, vector<2x128xf32> -> vector<2x128xf32>
    %69 = arith.addf %67, %68 : vector<2x128xf32>
    %70 = vector.extract_strided_slice %69 {offsets = [0, 0], sizes = [2, 32], strides = [1, 1]} : vector<2x128xf32> to vector<2x32xf32>
    %71 = arith.negf %70 : vector<2x32xf32>
    %72 = math.exp %71 : vector<2x32xf32>
    %cst_22 = arith.constant 1.000000e+00 : f32
    %73 = vector.broadcast %cst_22 : f32 to vector<2x32xf32>
    %74 = arith.addf %73, %72 : vector<2x32xf32>
    %75 = arith.divf %73, %74 : vector<2x32xf32>
    %76 = vector.extract_strided_slice %69 {offsets = [0, 32], sizes = [2, 32], strides = [1, 1]} : vector<2x128xf32> to vector<2x32xf32>
    %77 = arith.negf %76 : vector<2x32xf32>
    %78 = math.exp %77 : vector<2x32xf32>
    %cst_23 = arith.constant 1.000000e+00 : f32
    %79 = vector.broadcast %cst_23 : f32 to vector<2x32xf32>
    %80 = arith.addf %79, %78 : vector<2x32xf32>
    %81 = arith.divf %79, %80 : vector<2x32xf32>
    %82 = vector.extract_strided_slice %69 {offsets = [0, 64], sizes = [2, 32], strides = [1, 1]} : vector<2x128xf32> to vector<2x32xf32>
    %83 = math.tanh %82 : vector<2x32xf32>
    %84 = vector.extract_strided_slice %69 {offsets = [0, 96], sizes = [2, 32], strides = [1, 1]} : vector<2x128xf32> to vector<2x32xf32>
    %85 = arith.negf %84 : vector<2x32xf32>
    %86 = math.exp %85 : vector<2x32xf32>
    %cst_24 = arith.constant 1.000000e+00 : f32
    %87 = vector.broadcast %cst_24 : f32 to vector<2x32xf32>
    %88 = arith.addf %87, %86 : vector<2x32xf32>
    %89 = arith.divf %87, %88 : vector<2x32xf32>
    %90 = arith.mulf %81, %64 : vector<2x32xf32>
    %91 = arith.mulf %75, %83 : vector<2x32xf32>
    %92 = arith.addf %90, %91 : vector<2x32xf32>
    %93 = math.tanh %92 : vector<2x32xf32>
    %94 = arith.mulf %89, %93 : vector<2x32xf32>
    %95 = vector.extract_strided_slice %8 {offsets = [0, 384], sizes = [2, 128], strides = [1, 1]} : vector<2x1024xf32> to vector<2x128xf32>
    %cst_25 = arith.constant dense<0.000000e+00> : vector<2x128xf32>
    %96 = tpu.matmul %94, %0, %cst_25 {dimension_numbers = #tpu.dot_dimension_numbers<[1], [0], [0], [1], [0, 0, 1, 1], [], []>} : vector<2x32xf32>, vector<32x128xf32>, vector<2x128xf32> -> vector<2x128xf32>
    %97 = arith.addf %95, %96 : vector<2x128xf32>
    %98 = vector.extract_strided_slice %97 {offsets = [0, 0], sizes = [2, 32], strides = [1, 1]} : vector<2x128xf32> to vector<2x32xf32>
    %99 = arith.negf %98 : vector<2x32xf32>
    %100 = math.exp %99 : vector<2x32xf32>
    %cst_26 = arith.constant 1.000000e+00 : f32
    %101 = vector.broadcast %cst_26 : f32 to vector<2x32xf32>
    %102 = arith.addf %101, %100 : vector<2x32xf32>
    %103 = arith.divf %101, %102 : vector<2x32xf32>
    %104 = vector.extract_strided_slice %97 {offsets = [0, 32], sizes = [2, 32], strides = [1, 1]} : vector<2x128xf32> to vector<2x32xf32>
    %105 = arith.negf %104 : vector<2x32xf32>
    %106 = math.exp %105 : vector<2x32xf32>
    %cst_27 = arith.constant 1.000000e+00 : f32
    %107 = vector.broadcast %cst_27 : f32 to vector<2x32xf32>
    %108 = arith.addf %107, %106 : vector<2x32xf32>
    %109 = arith.divf %107, %108 : vector<2x32xf32>
    %110 = vector.extract_strided_slice %97 {offsets = [0, 64], sizes = [2, 32], strides = [1, 1]} : vector<2x128xf32> to vector<2x32xf32>
    %111 = math.tanh %110 : vector<2x32xf32>
    %112 = vector.extract_strided_slice %97 {offsets = [0, 96], sizes = [2, 32], strides = [1, 1]} : vector<2x128xf32> to vector<2x32xf32>
    %113 = arith.negf %112 : vector<2x32xf32>
    %114 = math.exp %113 : vector<2x32xf32>
    %cst_28 = arith.constant 1.000000e+00 : f32
    %115 = vector.broadcast %cst_28 : f32 to vector<2x32xf32>
    %116 = arith.addf %115, %114 : vector<2x32xf32>
    %117 = arith.divf %115, %116 : vector<2x32xf32>
    %118 = arith.mulf %109, %92 : vector<2x32xf32>
    %119 = arith.mulf %103, %111 : vector<2x32xf32>
    %120 = arith.addf %118, %119 : vector<2x32xf32>
    %121 = math.tanh %120 : vector<2x32xf32>
    %122 = arith.mulf %117, %121 : vector<2x32xf32>
    %123 = vector.extract_strided_slice %8 {offsets = [0, 512], sizes = [2, 128], strides = [1, 1]} : vector<2x1024xf32> to vector<2x128xf32>
    %cst_29 = arith.constant dense<0.000000e+00> : vector<2x128xf32>
    %124 = tpu.matmul %122, %0, %cst_29 {dimension_numbers = #tpu.dot_dimension_numbers<[1], [0], [0], [1], [0, 0, 1, 1], [], []>} : vector<2x32xf32>, vector<32x128xf32>, vector<2x128xf32> -> vector<2x128xf32>
    %125 = arith.addf %123, %124 : vector<2x128xf32>
    %126 = vector.extract_strided_slice %125 {offsets = [0, 0], sizes = [2, 32], strides = [1, 1]} : vector<2x128xf32> to vector<2x32xf32>
    %127 = arith.negf %126 : vector<2x32xf32>
    %128 = math.exp %127 : vector<2x32xf32>
    %cst_30 = arith.constant 1.000000e+00 : f32
    %129 = vector.broadcast %cst_30 : f32 to vector<2x32xf32>
    %130 = arith.addf %129, %128 : vector<2x32xf32>
    %131 = arith.divf %129, %130 : vector<2x32xf32>
    %132 = vector.extract_strided_slice %125 {offsets = [0, 32], sizes = [2, 32], strides = [1, 1]} : vector<2x128xf32> to vector<2x32xf32>
    %133 = arith.negf %132 : vector<2x32xf32>
    %134 = math.exp %133 : vector<2x32xf32>
    %cst_31 = arith.constant 1.000000e+00 : f32
    %135 = vector.broadcast %cst_31 : f32 to vector<2x32xf32>
    %136 = arith.addf %135, %134 : vector<2x32xf32>
    %137 = arith.divf %135, %136 : vector<2x32xf32>
    %138 = vector.extract_strided_slice %125 {offsets = [0, 64], sizes = [2, 32], strides = [1, 1]} : vector<2x128xf32> to vector<2x32xf32>
    %139 = math.tanh %138 : vector<2x32xf32>
    %140 = vector.extract_strided_slice %125 {offsets = [0, 96], sizes = [2, 32], strides = [1, 1]} : vector<2x128xf32> to vector<2x32xf32>
    %141 = arith.negf %140 : vector<2x32xf32>
    %142 = math.exp %141 : vector<2x32xf32>
    %cst_32 = arith.constant 1.000000e+00 : f32
    %143 = vector.broadcast %cst_32 : f32 to vector<2x32xf32>
    %144 = arith.addf %143, %142 : vector<2x32xf32>
    %145 = arith.divf %143, %144 : vector<2x32xf32>
    %146 = arith.mulf %137, %120 : vector<2x32xf32>
    %147 = arith.mulf %131, %139 : vector<2x32xf32>
    %148 = arith.addf %146, %147 : vector<2x32xf32>
    %149 = math.tanh %148 : vector<2x32xf32>
    %150 = arith.mulf %145, %149 : vector<2x32xf32>
    %151 = vector.extract_strided_slice %8 {offsets = [0, 640], sizes = [2, 128], strides = [1, 1]} : vector<2x1024xf32> to vector<2x128xf32>
    %cst_33 = arith.constant dense<0.000000e+00> : vector<2x128xf32>
    %152 = tpu.matmul %150, %0, %cst_33 {dimension_numbers = #tpu.dot_dimension_numbers<[1], [0], [0], [1], [0, 0, 1, 1], [], []>} : vector<2x32xf32>, vector<32x128xf32>, vector<2x128xf32> -> vector<2x128xf32>
    %153 = arith.addf %151, %152 : vector<2x128xf32>
    %154 = vector.extract_strided_slice %153 {offsets = [0, 0], sizes = [2, 32], strides = [1, 1]} : vector<2x128xf32> to vector<2x32xf32>
    %155 = arith.negf %154 : vector<2x32xf32>
    %156 = math.exp %155 : vector<2x32xf32>
    %cst_34 = arith.constant 1.000000e+00 : f32
    %157 = vector.broadcast %cst_34 : f32 to vector<2x32xf32>
    %158 = arith.addf %157, %156 : vector<2x32xf32>
    %159 = arith.divf %157, %158 : vector<2x32xf32>
    %160 = vector.extract_strided_slice %153 {offsets = [0, 32], sizes = [2, 32], strides = [1, 1]} : vector<2x128xf32> to vector<2x32xf32>
    %161 = arith.negf %160 : vector<2x32xf32>
    %162 = math.exp %161 : vector<2x32xf32>
    %cst_35 = arith.constant 1.000000e+00 : f32
    %163 = vector.broadcast %cst_35 : f32 to vector<2x32xf32>
    %164 = arith.addf %163, %162 : vector<2x32xf32>
    %165 = arith.divf %163, %164 : vector<2x32xf32>
    %166 = vector.extract_strided_slice %153 {offsets = [0, 64], sizes = [2, 32], strides = [1, 1]} : vector<2x128xf32> to vector<2x32xf32>
    %167 = math.tanh %166 : vector<2x32xf32>
    %168 = vector.extract_strided_slice %153 {offsets = [0, 96], sizes = [2, 32], strides = [1, 1]} : vector<2x128xf32> to vector<2x32xf32>
    %169 = arith.negf %168 : vector<2x32xf32>
    %170 = math.exp %169 : vector<2x32xf32>
    %cst_36 = arith.constant 1.000000e+00 : f32
    %171 = vector.broadcast %cst_36 : f32 to vector<2x32xf32>
    %172 = arith.addf %171, %170 : vector<2x32xf32>
    %173 = arith.divf %171, %172 : vector<2x32xf32>
    %174 = arith.mulf %165, %148 : vector<2x32xf32>
    %175 = arith.mulf %159, %167 : vector<2x32xf32>
    %176 = arith.addf %174, %175 : vector<2x32xf32>
    %177 = math.tanh %176 : vector<2x32xf32>
    %178 = arith.mulf %173, %177 : vector<2x32xf32>
    %179 = vector.extract_strided_slice %8 {offsets = [0, 768], sizes = [2, 128], strides = [1, 1]} : vector<2x1024xf32> to vector<2x128xf32>
    %cst_37 = arith.constant dense<0.000000e+00> : vector<2x128xf32>
    %180 = tpu.matmul %178, %0, %cst_37 {dimension_numbers = #tpu.dot_dimension_numbers<[1], [0], [0], [1], [0, 0, 1, 1], [], []>} : vector<2x32xf32>, vector<32x128xf32>, vector<2x128xf32> -> vector<2x128xf32>
    %181 = arith.addf %179, %180 : vector<2x128xf32>
    %182 = vector.extract_strided_slice %181 {offsets = [0, 0], sizes = [2, 32], strides = [1, 1]} : vector<2x128xf32> to vector<2x32xf32>
    %183 = arith.negf %182 : vector<2x32xf32>
    %184 = math.exp %183 : vector<2x32xf32>
    %cst_38 = arith.constant 1.000000e+00 : f32
    %185 = vector.broadcast %cst_38 : f32 to vector<2x32xf32>
    %186 = arith.addf %185, %184 : vector<2x32xf32>
    %187 = arith.divf %185, %186 : vector<2x32xf32>
    %188 = vector.extract_strided_slice %181 {offsets = [0, 32], sizes = [2, 32], strides = [1, 1]} : vector<2x128xf32> to vector<2x32xf32>
    %189 = arith.negf %188 : vector<2x32xf32>
    %190 = math.exp %189 : vector<2x32xf32>
    %cst_39 = arith.constant 1.000000e+00 : f32
    %191 = vector.broadcast %cst_39 : f32 to vector<2x32xf32>
    %192 = arith.addf %191, %190 : vector<2x32xf32>
    %193 = arith.divf %191, %192 : vector<2x32xf32>
    %194 = vector.extract_strided_slice %181 {offsets = [0, 64], sizes = [2, 32], strides = [1, 1]} : vector<2x128xf32> to vector<2x32xf32>
    %195 = math.tanh %194 : vector<2x32xf32>
    %196 = vector.extract_strided_slice %181 {offsets = [0, 96], sizes = [2, 32], strides = [1, 1]} : vector<2x128xf32> to vector<2x32xf32>
    %197 = arith.negf %196 : vector<2x32xf32>
    %198 = math.exp %197 : vector<2x32xf32>
    %cst_40 = arith.constant 1.000000e+00 : f32
    %199 = vector.broadcast %cst_40 : f32 to vector<2x32xf32>
    %200 = arith.addf %199, %198 : vector<2x32xf32>
    %201 = arith.divf %199, %200 : vector<2x32xf32>
    %202 = arith.mulf %193, %176 : vector<2x32xf32>
    %203 = arith.mulf %187, %195 : vector<2x32xf32>
    %204 = arith.addf %202, %203 : vector<2x32xf32>
    %205 = math.tanh %204 : vector<2x32xf32>
    %206 = arith.mulf %201, %205 : vector<2x32xf32>
    %207 = vector.extract_strided_slice %8 {offsets = [0, 896], sizes = [2, 128], strides = [1, 1]} : vector<2x1024xf32> to vector<2x128xf32>
    %cst_41 = arith.constant dense<0.000000e+00> : vector<2x128xf32>
    %208 = tpu.matmul %206, %0, %cst_41 {dimension_numbers = #tpu.dot_dimension_numbers<[1], [0], [0], [1], [0, 0, 1, 1], [], []>} : vector<2x32xf32>, vector<32x128xf32>, vector<2x128xf32> -> vector<2x128xf32>
    %209 = arith.addf %207, %208 : vector<2x128xf32>
    %210 = vector.extract_strided_slice %209 {offsets = [0, 0], sizes = [2, 32], strides = [1, 1]} : vector<2x128xf32> to vector<2x32xf32>
    %211 = arith.negf %210 : vector<2x32xf32>
    %212 = math.exp %211 : vector<2x32xf32>
    %cst_42 = arith.constant 1.000000e+00 : f32
    %213 = vector.broadcast %cst_42 : f32 to vector<2x32xf32>
    %214 = arith.addf %213, %212 : vector<2x32xf32>
    %215 = arith.divf %213, %214 : vector<2x32xf32>
    %216 = vector.extract_strided_slice %209 {offsets = [0, 32], sizes = [2, 32], strides = [1, 1]} : vector<2x128xf32> to vector<2x32xf32>
    %217 = arith.negf %216 : vector<2x32xf32>
    %218 = math.exp %217 : vector<2x32xf32>
    %cst_43 = arith.constant 1.000000e+00 : f32
    %219 = vector.broadcast %cst_43 : f32 to vector<2x32xf32>
    %220 = arith.addf %219, %218 : vector<2x32xf32>
    %221 = arith.divf %219, %220 : vector<2x32xf32>
    %222 = vector.extract_strided_slice %209 {offsets = [0, 64], sizes = [2, 32], strides = [1, 1]} : vector<2x128xf32> to vector<2x32xf32>
    %223 = math.tanh %222 : vector<2x32xf32>
    %224 = vector.extract_strided_slice %209 {offsets = [0, 96], sizes = [2, 32], strides = [1, 1]} : vector<2x128xf32> to vector<2x32xf32>
    %225 = arith.negf %224 : vector<2x32xf32>
    %226 = math.exp %225 : vector<2x32xf32>
    %cst_44 = arith.constant 1.000000e+00 : f32
    %227 = vector.broadcast %cst_44 : f32 to vector<2x32xf32>
    %228 = arith.addf %227, %226 : vector<2x32xf32>
    %229 = arith.divf %227, %228 : vector<2x32xf32>
    %230 = arith.mulf %221, %204 : vector<2x32xf32>
    %231 = arith.mulf %215, %223 : vector<2x32xf32>
    %232 = arith.addf %230, %231 : vector<2x32xf32>
    %233 = math.tanh %232 : vector<2x32xf32>
    %234 = arith.mulf %229, %233 : vector<2x32xf32>
    %c0_45 = arith.constant 0 : index
    %c0_46 = arith.constant 0 : index
    %235 = vector.load %arg5[%c0_45, %c0_46] : memref<1x128xf32, #tpu.memory_space<vmem>>, vector<1x128xf32>
    %236 = vector.shape_cast %235 : vector<1x128xf32> to vector<1x128xf32>
    %237 = vector.broadcast %236 : vector<1x128xf32> to vector<2x128xf32>
    %cst_47 = arith.constant dense<0.000000e+00> : vector<2x128xf32>
    %238 = tpu.matmul %234, %1, %cst_47 {dimension_numbers = #tpu.dot_dimension_numbers<[1], [0], [0], [1], [0, 0, 1, 1], [], []>} : vector<2x32xf32>, vector<32x128xf32>, vector<2x128xf32> -> vector<2x128xf32>
    %239 = arith.addf %238, %237 : vector<2x128xf32>
    %240 = vector.extract_strided_slice %239 {offsets = [0, 0], sizes = [2, 32], strides = [1, 1]} : vector<2x128xf32> to vector<2x32xf32>
    %241 = arith.negf %240 : vector<2x32xf32>
    %242 = math.exp %241 : vector<2x32xf32>
    %cst_48 = arith.constant 1.000000e+00 : f32
    %243 = vector.broadcast %cst_48 : f32 to vector<2x32xf32>
    %244 = arith.addf %243, %242 : vector<2x32xf32>
    %245 = arith.divf %243, %244 : vector<2x32xf32>
    %246 = vector.extract_strided_slice %239 {offsets = [0, 32], sizes = [2, 32], strides = [1, 1]} : vector<2x128xf32> to vector<2x32xf32>
    %247 = arith.negf %246 : vector<2x32xf32>
    %248 = math.exp %247 : vector<2x32xf32>
    %cst_49 = arith.constant 1.000000e+00 : f32
    %249 = vector.broadcast %cst_49 : f32 to vector<2x32xf32>
    %250 = arith.addf %249, %248 : vector<2x32xf32>
    %251 = arith.divf %249, %250 : vector<2x32xf32>
    %252 = vector.extract_strided_slice %239 {offsets = [0, 64], sizes = [2, 32], strides = [1, 1]} : vector<2x128xf32> to vector<2x32xf32>
    %253 = math.tanh %252 : vector<2x32xf32>
    %254 = vector.extract_strided_slice %239 {offsets = [0, 96], sizes = [2, 32], strides = [1, 1]} : vector<2x128xf32> to vector<2x32xf32>
    %255 = arith.negf %254 : vector<2x32xf32>
    %256 = math.exp %255 : vector<2x32xf32>
    %cst_50 = arith.constant 1.000000e+00 : f32
    %257 = vector.broadcast %cst_50 : f32 to vector<2x32xf32>
    %258 = arith.addf %257, %256 : vector<2x32xf32>
    %259 = arith.divf %257, %258 : vector<2x32xf32>
    %260 = arith.mulf %251, %232 : vector<2x32xf32>
    %261 = arith.mulf %245, %253 : vector<2x32xf32>
    %262 = arith.addf %260, %261 : vector<2x32xf32>
    %263 = math.tanh %262 : vector<2x32xf32>
    %264 = arith.mulf %259, %263 : vector<2x32xf32>
    %c0_51 = arith.constant 0 : index
    %c0_52 = arith.constant 0 : index
    %265 = vector.load %arg7[%c0_51, %c0_52] : memref<1x128xf32, #tpu.memory_space<vmem>>, vector<1x128xf32>
    %266 = vector.shape_cast %265 : vector<1x128xf32> to vector<1x128xf32>
    %267 = vector.broadcast %266 : vector<1x128xf32> to vector<2x128xf32>
    %cst_53 = arith.constant dense<0.000000e+00> : vector<2x128xf32>
    %268 = tpu.matmul %264, %2, %cst_53 {dimension_numbers = #tpu.dot_dimension_numbers<[1], [0], [0], [1], [0, 0, 1, 1], [], []>} : vector<2x32xf32>, vector<32x128xf32>, vector<2x128xf32> -> vector<2x128xf32>
    %269 = arith.addf %268, %267 : vector<2x128xf32>
    %270 = vector.extract_strided_slice %269 {offsets = [0, 0], sizes = [2, 32], strides = [1, 1]} : vector<2x128xf32> to vector<2x32xf32>
    %271 = arith.negf %270 : vector<2x32xf32>
    %272 = math.exp %271 : vector<2x32xf32>
    %cst_54 = arith.constant 1.000000e+00 : f32
    %273 = vector.broadcast %cst_54 : f32 to vector<2x32xf32>
    %274 = arith.addf %273, %272 : vector<2x32xf32>
    %275 = arith.divf %273, %274 : vector<2x32xf32>
    %276 = vector.extract_strided_slice %269 {offsets = [0, 32], sizes = [2, 32], strides = [1, 1]} : vector<2x128xf32> to vector<2x32xf32>
    %277 = arith.negf %276 : vector<2x32xf32>
    %278 = math.exp %277 : vector<2x32xf32>
    %cst_55 = arith.constant 1.000000e+00 : f32
    %279 = vector.broadcast %cst_55 : f32 to vector<2x32xf32>
    %280 = arith.addf %279, %278 : vector<2x32xf32>
    %281 = arith.divf %279, %280 : vector<2x32xf32>
    %282 = vector.extract_strided_slice %269 {offsets = [0, 64], sizes = [2, 32], strides = [1, 1]} : vector<2x128xf32> to vector<2x32xf32>
    %283 = math.tanh %282 : vector<2x32xf32>
    %284 = vector.extract_strided_slice %269 {offsets = [0, 96], sizes = [2, 32], strides = [1, 1]} : vector<2x128xf32> to vector<2x32xf32>
    %285 = arith.negf %284 : vector<2x32xf32>
    %286 = math.exp %285 : vector<2x32xf32>
    %cst_56 = arith.constant 1.000000e+00 : f32
    %287 = vector.broadcast %cst_56 : f32 to vector<2x32xf32>
    %288 = arith.addf %287, %286 : vector<2x32xf32>
    %289 = arith.divf %287, %288 : vector<2x32xf32>
    %290 = arith.mulf %281, %262 : vector<2x32xf32>
    %291 = arith.mulf %275, %283 : vector<2x32xf32>
    %292 = arith.addf %290, %291 : vector<2x32xf32>
    %293 = math.tanh %292 : vector<2x32xf32>
    %294 = arith.mulf %289, %293 : vector<2x32xf32>
    %cst_57 = arith.constant dense<0.000000e+00> : vector<2x128xf32>
    %295 = tpu.matmul %294, %2, %cst_57 {dimension_numbers = #tpu.dot_dimension_numbers<[1], [0], [0], [1], [0, 0, 1, 1], [], []>} : vector<2x32xf32>, vector<32x128xf32>, vector<2x128xf32> -> vector<2x128xf32>
    %296 = arith.addf %295, %267 : vector<2x128xf32>
    %297 = vector.extract_strided_slice %296 {offsets = [0, 0], sizes = [2, 32], strides = [1, 1]} : vector<2x128xf32> to vector<2x32xf32>
    %298 = arith.negf %297 : vector<2x32xf32>
    %299 = math.exp %298 : vector<2x32xf32>
    %cst_58 = arith.constant 1.000000e+00 : f32
    %300 = vector.broadcast %cst_58 : f32 to vector<2x32xf32>
    %301 = arith.addf %300, %299 : vector<2x32xf32>
    %302 = arith.divf %300, %301 : vector<2x32xf32>
    %303 = vector.extract_strided_slice %296 {offsets = [0, 32], sizes = [2, 32], strides = [1, 1]} : vector<2x128xf32> to vector<2x32xf32>
    %304 = arith.negf %303 : vector<2x32xf32>
    %305 = math.exp %304 : vector<2x32xf32>
    %cst_59 = arith.constant 1.000000e+00 : f32
    %306 = vector.broadcast %cst_59 : f32 to vector<2x32xf32>
    %307 = arith.addf %306, %305 : vector<2x32xf32>
    %308 = arith.divf %306, %307 : vector<2x32xf32>
    %309 = vector.extract_strided_slice %296 {offsets = [0, 64], sizes = [2, 32], strides = [1, 1]} : vector<2x128xf32> to vector<2x32xf32>
    %310 = math.tanh %309 : vector<2x32xf32>
    %311 = vector.extract_strided_slice %296 {offsets = [0, 96], sizes = [2, 32], strides = [1, 1]} : vector<2x128xf32> to vector<2x32xf32>
    %312 = arith.negf %311 : vector<2x32xf32>
    %313 = math.exp %312 : vector<2x32xf32>
    %cst_60 = arith.constant 1.000000e+00 : f32
    %314 = vector.broadcast %cst_60 : f32 to vector<2x32xf32>
    %315 = arith.addf %314, %313 : vector<2x32xf32>
    %316 = arith.divf %314, %315 : vector<2x32xf32>
    %317 = arith.mulf %308, %292 : vector<2x32xf32>
    %318 = arith.mulf %302, %310 : vector<2x32xf32>
    %319 = arith.addf %317, %318 : vector<2x32xf32>
    %320 = math.tanh %319 : vector<2x32xf32>
    %321 = arith.mulf %316, %320 : vector<2x32xf32>
    %cst_61 = arith.constant dense<0.000000e+00> : vector<2x128xf32>
    %322 = tpu.matmul %321, %2, %cst_61 {dimension_numbers = #tpu.dot_dimension_numbers<[1], [0], [0], [1], [0, 0, 1, 1], [], []>} : vector<2x32xf32>, vector<32x128xf32>, vector<2x128xf32> -> vector<2x128xf32>
    %323 = arith.addf %322, %267 : vector<2x128xf32>
    %324 = vector.extract_strided_slice %323 {offsets = [0, 0], sizes = [2, 32], strides = [1, 1]} : vector<2x128xf32> to vector<2x32xf32>
    %325 = arith.negf %324 : vector<2x32xf32>
    %326 = math.exp %325 : vector<2x32xf32>
    %cst_62 = arith.constant 1.000000e+00 : f32
    %327 = vector.broadcast %cst_62 : f32 to vector<2x32xf32>
    %328 = arith.addf %327, %326 : vector<2x32xf32>
    %329 = arith.divf %327, %328 : vector<2x32xf32>
    %330 = vector.extract_strided_slice %323 {offsets = [0, 32], sizes = [2, 32], strides = [1, 1]} : vector<2x128xf32> to vector<2x32xf32>
    %331 = arith.negf %330 : vector<2x32xf32>
    %332 = math.exp %331 : vector<2x32xf32>
    %cst_63 = arith.constant 1.000000e+00 : f32
    %333 = vector.broadcast %cst_63 : f32 to vector<2x32xf32>
    %334 = arith.addf %333, %332 : vector<2x32xf32>
    %335 = arith.divf %333, %334 : vector<2x32xf32>
    %336 = vector.extract_strided_slice %323 {offsets = [0, 64], sizes = [2, 32], strides = [1, 1]} : vector<2x128xf32> to vector<2x32xf32>
    %337 = math.tanh %336 : vector<2x32xf32>
    %338 = vector.extract_strided_slice %323 {offsets = [0, 96], sizes = [2, 32], strides = [1, 1]} : vector<2x128xf32> to vector<2x32xf32>
    %339 = arith.negf %338 : vector<2x32xf32>
    %340 = math.exp %339 : vector<2x32xf32>
    %cst_64 = arith.constant 1.000000e+00 : f32
    %341 = vector.broadcast %cst_64 : f32 to vector<2x32xf32>
    %342 = arith.addf %341, %340 : vector<2x32xf32>
    %343 = arith.divf %341, %342 : vector<2x32xf32>
    %344 = arith.mulf %335, %319 : vector<2x32xf32>
    %345 = arith.mulf %329, %337 : vector<2x32xf32>
    %346 = arith.addf %344, %345 : vector<2x32xf32>
    %347 = math.tanh %346 : vector<2x32xf32>
    %348 = arith.mulf %343, %347 : vector<2x32xf32>
    %cst_65 = arith.constant dense<0.000000e+00> : vector<2x128xf32>
    %349 = tpu.matmul %348, %2, %cst_65 {dimension_numbers = #tpu.dot_dimension_numbers<[1], [0], [0], [1], [0, 0, 1, 1], [], []>} : vector<2x32xf32>, vector<32x128xf32>, vector<2x128xf32> -> vector<2x128xf32>
    %350 = arith.addf %349, %267 : vector<2x128xf32>
    %351 = vector.extract_strided_slice %350 {offsets = [0, 0], sizes = [2, 32], strides = [1, 1]} : vector<2x128xf32> to vector<2x32xf32>
    %352 = arith.negf %351 : vector<2x32xf32>
    %353 = math.exp %352 : vector<2x32xf32>
    %cst_66 = arith.constant 1.000000e+00 : f32
    %354 = vector.broadcast %cst_66 : f32 to vector<2x32xf32>
    %355 = arith.addf %354, %353 : vector<2x32xf32>
    %356 = arith.divf %354, %355 : vector<2x32xf32>
    %357 = vector.extract_strided_slice %350 {offsets = [0, 32], sizes = [2, 32], strides = [1, 1]} : vector<2x128xf32> to vector<2x32xf32>
    %358 = arith.negf %357 : vector<2x32xf32>
    %359 = math.exp %358 : vector<2x32xf32>
    %cst_67 = arith.constant 1.000000e+00 : f32
    %360 = vector.broadcast %cst_67 : f32 to vector<2x32xf32>
    %361 = arith.addf %360, %359 : vector<2x32xf32>
    %362 = arith.divf %360, %361 : vector<2x32xf32>
    %363 = vector.extract_strided_slice %350 {offsets = [0, 64], sizes = [2, 32], strides = [1, 1]} : vector<2x128xf32> to vector<2x32xf32>
    %364 = math.tanh %363 : vector<2x32xf32>
    %365 = vector.extract_strided_slice %350 {offsets = [0, 96], sizes = [2, 32], strides = [1, 1]} : vector<2x128xf32> to vector<2x32xf32>
    %366 = arith.negf %365 : vector<2x32xf32>
    %367 = math.exp %366 : vector<2x32xf32>
    %cst_68 = arith.constant 1.000000e+00 : f32
    %368 = vector.broadcast %cst_68 : f32 to vector<2x32xf32>
    %369 = arith.addf %368, %367 : vector<2x32xf32>
    %370 = arith.divf %368, %369 : vector<2x32xf32>
    %371 = arith.mulf %362, %346 : vector<2x32xf32>
    %372 = arith.mulf %356, %364 : vector<2x32xf32>
    %373 = arith.addf %371, %372 : vector<2x32xf32>
    %374 = math.tanh %373 : vector<2x32xf32>
    %375 = arith.mulf %370, %374 : vector<2x32xf32>
    %cst_69 = arith.constant dense<0.000000e+00> : vector<2x128xf32>
    %376 = tpu.matmul %375, %2, %cst_69 {dimension_numbers = #tpu.dot_dimension_numbers<[1], [0], [0], [1], [0, 0, 1, 1], [], []>} : vector<2x32xf32>, vector<32x128xf32>, vector<2x128xf32> -> vector<2x128xf32>
    %377 = arith.addf %376, %267 : vector<2x128xf32>
    %378 = vector.extract_strided_slice %377 {offsets = [0, 0], sizes = [2, 32], strides = [1, 1]} : vector<2x128xf32> to vector<2x32xf32>
    %379 = arith.negf %378 : vector<2x32xf32>
    %380 = math.exp %379 : vector<2x32xf32>
    %cst_70 = arith.constant 1.000000e+00 : f32
    %381 = vector.broadcast %cst_70 : f32 to vector<2x32xf32>
    %382 = arith.addf %381, %380 : vector<2x32xf32>
    %383 = arith.divf %381, %382 : vector<2x32xf32>
    %384 = vector.extract_strided_slice %377 {offsets = [0, 32], sizes = [2, 32], strides = [1, 1]} : vector<2x128xf32> to vector<2x32xf32>
    %385 = arith.negf %384 : vector<2x32xf32>
    %386 = math.exp %385 : vector<2x32xf32>
    %cst_71 = arith.constant 1.000000e+00 : f32
    %387 = vector.broadcast %cst_71 : f32 to vector<2x32xf32>
    %388 = arith.addf %387, %386 : vector<2x32xf32>
    %389 = arith.divf %387, %388 : vector<2x32xf32>
    %390 = vector.extract_strided_slice %377 {offsets = [0, 64], sizes = [2, 32], strides = [1, 1]} : vector<2x128xf32> to vector<2x32xf32>
    %391 = math.tanh %390 : vector<2x32xf32>
    %392 = vector.extract_strided_slice %377 {offsets = [0, 96], sizes = [2, 32], strides = [1, 1]} : vector<2x128xf32> to vector<2x32xf32>
    %393 = arith.negf %392 : vector<2x32xf32>
    %394 = math.exp %393 : vector<2x32xf32>
    %cst_72 = arith.constant 1.000000e+00 : f32
    %395 = vector.broadcast %cst_72 : f32 to vector<2x32xf32>
    %396 = arith.addf %395, %394 : vector<2x32xf32>
    %397 = arith.divf %395, %396 : vector<2x32xf32>
    %398 = arith.mulf %389, %373 : vector<2x32xf32>
    %399 = arith.mulf %383, %391 : vector<2x32xf32>
    %400 = arith.addf %398, %399 : vector<2x32xf32>
    %401 = math.tanh %400 : vector<2x32xf32>
    %402 = arith.mulf %397, %401 : vector<2x32xf32>
    %cst_73 = arith.constant dense<0.000000e+00> : vector<2x128xf32>
    %403 = tpu.matmul %402, %2, %cst_73 {dimension_numbers = #tpu.dot_dimension_numbers<[1], [0], [0], [1], [0, 0, 1, 1], [], []>} : vector<2x32xf32>, vector<32x128xf32>, vector<2x128xf32> -> vector<2x128xf32>
    %404 = arith.addf %403, %267 : vector<2x128xf32>
    %405 = vector.extract_strided_slice %404 {offsets = [0, 0], sizes = [2, 32], strides = [1, 1]} : vector<2x128xf32> to vector<2x32xf32>
    %406 = arith.negf %405 : vector<2x32xf32>
    %407 = math.exp %406 : vector<2x32xf32>
    %cst_74 = arith.constant 1.000000e+00 : f32
    %408 = vector.broadcast %cst_74 : f32 to vector<2x32xf32>
    %409 = arith.addf %408, %407 : vector<2x32xf32>
    %410 = arith.divf %408, %409 : vector<2x32xf32>
    %411 = vector.extract_strided_slice %404 {offsets = [0, 32], sizes = [2, 32], strides = [1, 1]} : vector<2x128xf32> to vector<2x32xf32>
    %412 = arith.negf %411 : vector<2x32xf32>
    %413 = math.exp %412 : vector<2x32xf32>
    %cst_75 = arith.constant 1.000000e+00 : f32
    %414 = vector.broadcast %cst_75 : f32 to vector<2x32xf32>
    %415 = arith.addf %414, %413 : vector<2x32xf32>
    %416 = arith.divf %414, %415 : vector<2x32xf32>
    %417 = vector.extract_strided_slice %404 {offsets = [0, 64], sizes = [2, 32], strides = [1, 1]} : vector<2x128xf32> to vector<2x32xf32>
    %418 = math.tanh %417 : vector<2x32xf32>
    %419 = vector.extract_strided_slice %404 {offsets = [0, 96], sizes = [2, 32], strides = [1, 1]} : vector<2x128xf32> to vector<2x32xf32>
    %420 = arith.negf %419 : vector<2x32xf32>
    %421 = math.exp %420 : vector<2x32xf32>
    %cst_76 = arith.constant 1.000000e+00 : f32
    %422 = vector.broadcast %cst_76 : f32 to vector<2x32xf32>
    %423 = arith.addf %422, %421 : vector<2x32xf32>
    %424 = arith.divf %422, %423 : vector<2x32xf32>
    %425 = arith.mulf %416, %400 : vector<2x32xf32>
    %426 = arith.mulf %410, %418 : vector<2x32xf32>
    %427 = arith.addf %425, %426 : vector<2x32xf32>
    %428 = math.tanh %427 : vector<2x32xf32>
    %429 = arith.mulf %424, %428 : vector<2x32xf32>
    %cst_77 = arith.constant dense<0.000000e+00> : vector<2x128xf32>
    %430 = tpu.matmul %429, %2, %cst_77 {dimension_numbers = #tpu.dot_dimension_numbers<[1], [0], [0], [1], [0, 0, 1, 1], [], []>} : vector<2x32xf32>, vector<32x128xf32>, vector<2x128xf32> -> vector<2x128xf32>
    %431 = arith.addf %430, %267 : vector<2x128xf32>
    %432 = vector.extract_strided_slice %431 {offsets = [0, 0], sizes = [2, 32], strides = [1, 1]} : vector<2x128xf32> to vector<2x32xf32>
    %433 = arith.negf %432 : vector<2x32xf32>
    %434 = math.exp %433 : vector<2x32xf32>
    %cst_78 = arith.constant 1.000000e+00 : f32
    %435 = vector.broadcast %cst_78 : f32 to vector<2x32xf32>
    %436 = arith.addf %435, %434 : vector<2x32xf32>
    %437 = arith.divf %435, %436 : vector<2x32xf32>
    %438 = vector.extract_strided_slice %431 {offsets = [0, 32], sizes = [2, 32], strides = [1, 1]} : vector<2x128xf32> to vector<2x32xf32>
    %439 = arith.negf %438 : vector<2x32xf32>
    %440 = math.exp %439 : vector<2x32xf32>
    %cst_79 = arith.constant 1.000000e+00 : f32
    %441 = vector.broadcast %cst_79 : f32 to vector<2x32xf32>
    %442 = arith.addf %441, %440 : vector<2x32xf32>
    %443 = arith.divf %441, %442 : vector<2x32xf32>
    %444 = vector.extract_strided_slice %431 {offsets = [0, 64], sizes = [2, 32], strides = [1, 1]} : vector<2x128xf32> to vector<2x32xf32>
    %445 = math.tanh %444 : vector<2x32xf32>
    %446 = vector.extract_strided_slice %431 {offsets = [0, 96], sizes = [2, 32], strides = [1, 1]} : vector<2x128xf32> to vector<2x32xf32>
    %447 = arith.negf %446 : vector<2x32xf32>
    %448 = math.exp %447 : vector<2x32xf32>
    %cst_80 = arith.constant 1.000000e+00 : f32
    %449 = vector.broadcast %cst_80 : f32 to vector<2x32xf32>
    %450 = arith.addf %449, %448 : vector<2x32xf32>
    %451 = arith.divf %449, %450 : vector<2x32xf32>
    %452 = arith.mulf %443, %427 : vector<2x32xf32>
    %453 = arith.mulf %437, %445 : vector<2x32xf32>
    %454 = arith.addf %452, %453 : vector<2x32xf32>
    %455 = math.tanh %454 : vector<2x32xf32>
    %456 = arith.mulf %451, %455 : vector<2x32xf32>
    %457 = tpu.concatenate %264, %294, %321, %348, %375, %402, %429, %456 in 1 : vector<2x32xf32>, vector<2x32xf32>, vector<2x32xf32>, vector<2x32xf32>, vector<2x32xf32>, vector<2x32xf32>, vector<2x32xf32>, vector<2x32xf32> -> vector<2x256xf32>
    %c0_81 = arith.constant 0 : index
    %c0_82 = arith.constant 0 : index
    %458 = vector.load %arg8[%c0_81, %c0_82] : memref<256x8xf32, #tpu.memory_space<vmem>>, vector<256x8xf32>
    %cst_83 = arith.constant dense<0.000000e+00> : vector<2x8xf32>
    %459 = tpu.matmul %457, %458, %cst_83 {dimension_numbers = #tpu.dot_dimension_numbers<[1], [0], [0], [1], [0, 0, 1, 1], [], []>} : vector<2x256xf32>, vector<256x8xf32>, vector<2x8xf32> -> vector<2x8xf32>
    %c0_84 = arith.constant 0 : index
    %c0_85 = arith.constant 0 : index
    %460 = vector.load %arg9[%c0_84, %c0_85] : memref<1x8xf32, #tpu.memory_space<vmem>>, vector<1x8xf32>
    %461 = vector.broadcast %460 : vector<1x8xf32> to vector<2x8xf32>
    %462 = arith.addf %459, %461 : vector<2x8xf32>
    %c0_86 = arith.constant 0 : index
    %c0_87 = arith.constant 0 : index
    %463 = vector.load %arg10[%c0_86, %c0_87] : memref<2x8xf32, #tpu.memory_space<vmem>>, vector<2x8xf32>
    tpu.vector_store %arg10[%c0_86, %c0_87], %462 {strides = array<i32>} : memref<2x8xf32, #tpu.memory_space<vmem>>, vector<2x8xf32>,
    return
  }
}

</mosaic_0001>

<llo_original>
// kernel: tpu_custom_call.1
$region0: #{tpu_custom_call.1}
  #allocation0 [shape = 'u32[]', space=smem, size = 0x4, offset = 0x4, fixed_abs, tag = 'smem constant byte address 0x4 - core index']
  #allocation1 [shape = 'u32[72,128]{1,0:T(1,128)}', space=vmem, size = 0x9000, scoped, tag = 'internal scratch']
  %s0 = inlined_call_operand.vmem [shape: f32[2,32], index: 0, kind: input, shape index: {}]
  %s1 = inlined_call_operand.vmem [shape: f32[32,1024], index: 1, kind: input, shape index: {}]
  %s2 = inlined_call_operand.vmem [shape: f32[1,1024], index: 2, kind: input, shape index: {}]
  %s3 = inlined_call_operand.hbm [shape: f32[32,128], index: 3, kind: input, shape index: {}]
  %s4 = inlined_call_operand.hbm [shape: f32[32,128], index: 4, kind: input, shape index: {}]
  %s5 = inlined_call_operand.vmem [shape: f32[1,128], index: 5, kind: input, shape index: {}]
  %s6 = inlined_call_operand.hbm [shape: f32[32,128], index: 6, kind: input, shape index: {}]
  %s7 = inlined_call_operand.vmem [shape: f32[1,128], index: 7, kind: input, shape index: {}]
  %s8 = inlined_call_operand.vmem [shape: f32[256,8], index: 8, kind: input, shape index: {}]
  %s9 = inlined_call_operand.vmem [shape: f32[1,8], index: 9, kind: input, shape index: {}]
  %s10 = inlined_call_operand.hbm [shape: f32[2,8], index: 10, kind: output, shape index: {}]
  %s11 = sld [smem:[#allocation0]]
  $region62: #{tpu_custom_call.1} parent=0
    _
  %s13 = ssub.s32 1, %s11
  %s14 = scalar_select 0, %s13, %s11
  $region1: #{tpu_custom_call.1} parent=0
    #allocation2 [shape = 'u8[16384]{0}', space=vmem, size = 0x4000, scoped, tag = 'input window, operand 3, single buffered']
    #allocation3 [shape = 's32[1]{0}', space=sflag, size = 0x4, scoped, tag = 'scoped memory for tpu_custom_call.1']
    #allocation4 [shape = 's32[1]{0}', space=sflag, size = 0x4, scoped, tag = 'scoped memory for tpu_custom_call.1']
    #allocation5 [shape = 'u8[16384]{0}', space=vmem, size = 0x4000, scoped, tag = 'input window, operand 4, single buffered']
    #allocation6 [shape = 's32[1]{0}', space=sflag, size = 0x4, scoped, tag = 'scoped memory for tpu_custom_call.1']
    #allocation7 [shape = 'u8[16384]{0}', space=vmem, size = 0x4000, scoped, tag = 'input window, operand 6, single buffered']
    #allocation8 [shape = 'u8[1024]{0}', space=vmem, size = 0x400, scoped, tag = 'output window, operand 0, single buffered']
    %15 = vsyncpa [#allocation3], 0
    %16 = vsyncpa [#allocation6], 0
    %17 = vsyncpa [#allocation4], 0
    // Predicated region
    $region2: #{tpu_custom_call.1} parent=1 // pred_check
      _
    $region3: #{tpu_custom_call.1} parent=1 // pred_check_branch
      %19 = sbr.rel (0) target = $region5
    $region4: #{tpu_custom_call.1} parent=1 // pred_region
      _
    $region5: #{tpu_custom_call.1} parent=1 // pred_fallthru
      _
    // Predicated region
    $region6: #{tpu_custom_call.1} parent=1 // pred_check
      _
    $region7: #{tpu_custom_call.1} parent=1 // pred_check_branch
      %21 = sbr.rel (0) target = $region9
    $region8: #{tpu_custom_call.1} parent=1 // pred_region
      _
    $region9: #{tpu_custom_call.1} parent=1 // pred_fallthru
      _
    // Predicated region
    $region10: #{tpu_custom_call.1} parent=1 // pred_check
      _
    $region11: #{tpu_custom_call.1} parent=1 // pred_check_branch
      %23 = sbr.rel (0) target = $region13
    $region12: #{tpu_custom_call.1} parent=1 // pred_region
      _
    $region13: #{tpu_custom_call.1} parent=1 // pred_fallthru
      _
    // Predicated region
    $region14: #{tpu_custom_call.1} parent=1 // pred_check
      _
    $region15: #{tpu_custom_call.1} parent=1 // pred_check_branch
      %25 = sbr.rel (0) target = $region17
    $region16: #{tpu_custom_call.1} parent=1 // pred_region
      %27 = vsyncadd [#allocation3], 0
      %s28 = sshll.u32 %s3, 4
      %s29 = int_to_ptr.hbm [resolvable:$true] %s28
      %s30 = sshll.u32 [#allocation2], 4
      %s31 = int_to_ptr.vmem [resolvable:$true] %s30
      %36 = dma.hbm_to_vmem [thread:$0]  %s29, 512, %s31, [#allocation3], 128, 128, 8
    $region17: #{tpu_custom_call.1} parent=1 // pred_fallthru
      _
    // Predicated region
    $region18: #{tpu_custom_call.1} parent=1 // pred_check
      _
    $region19: #{tpu_custom_call.1} parent=1 // pred_check_branch
      %38 = sbr.rel (0) target = $region21
    $region20: #{tpu_custom_call.1} parent=1 // pred_region
      %40 = vsyncadd [#allocation6], 0
      %s41 = sshll.u32 %s4, 4
      %s42 = int_to_ptr.hbm [resolvable:$true] %s41
      %s43 = sshll.u32 [#allocation5], 4
      %s44 = int_to_ptr.vmem [resolvable:$true] %s43
      %49 = dma.hbm_to_vmem [thread:$0]  %s42, 512, %s44, [#allocation6], 128, 128, 8
    $region21: #{tpu_custom_call.1} parent=1 // pred_fallthru
      _
    // Predicated region
    $region22: #{tpu_custom_call.1} parent=1 // pred_check
      _
    $region23: #{tpu_custom_call.1} parent=1 // pred_check_branch
      %51 = sbr.rel (0) target = $region25
    $region24: #{tpu_custom_call.1} parent=1 // pred_region
      _
    $region25: #{tpu_custom_call.1} parent=1 // pred_fallthru
      _
    // Predicated region
    $region26: #{tpu_custom_call.1} parent=1 // pred_check
      _
    $region27: #{tpu_custom_call.1} parent=1 // pred_check_branch
      %53 = sbr.rel (0) target = $region29
    $region28: #{tpu_custom_call.1} parent=1 // pred_region
      %55 = vsyncadd [#allocation6], 0
      %s56 = sshll.u32 %s6, 4
      %s57 = int_to_ptr.hbm [resolvable:$true] %s56
      %s58 = sshll.u32 [#allocation7], 4
      %s59 = int_to_ptr.vmem [resolvable:$true] %s58
      %64 = dma.hbm_to_vmem [thread:$0]  %s57, 512, %s59, [#allocation6], 128, 128, 8
    $region29: #{tpu_custom_call.1} parent=1 // pred_fallthru
      _
    // Predicated region
    $region30: #{tpu_custom_call.1} parent=1 // pred_check
      _
    $region31: #{tpu_custom_call.1} parent=1 // pred_check_branch
      %66 = sbr.rel (0) target = $region33
    $region32: #{tpu_custom_call.1} parent=1 // pred_region
      _
    $region33: #{tpu_custom_call.1} parent=1 // pred_fallthru
      _
    // Predicated region
    $region34: #{tpu_custom_call.1} parent=1 // pred_check
      _
    $region35: #{tpu_custom_call.1} parent=1 // pred_check_branch
      %68 = sbr.rel (0) target = $region37
    $region36: #{tpu_custom_call.1} parent=1 // pred_region
      _
    $region37: #{tpu_custom_call.1} parent=1 // pred_fallthru
      _
    // Predicated region
    $region38: #{tpu_custom_call.1} parent=1 // pred_check
      _
    $region39: #{tpu_custom_call.1} parent=1 // pred_check_branch
      %70 = sbr.rel (0) target = $region41
    $region40: #{tpu_custom_call.1} parent=1 // pred_region
      _
    $region41: #{tpu_custom_call.1} parent=1 // pred_fallthru
      _
    // Predicated region
    $region42: #{tpu_custom_call.1} parent=1 // pred_check
      _
    $region43: #{tpu_custom_call.1} parent=1 // pred_check_branch
      %72 = sbr.rel (0) target = $region45
    $region44: #{tpu_custom_call.1} parent=1 // pred_region
      %74 = dma.done [#allocation3], 512
    $region45: #{tpu_custom_call.1} parent=1 // pred_fallthru
      _
    // Predicated region
    $region46: #{tpu_custom_call.1} parent=1 // pred_check
      _
    $region47: #{tpu_custom_call.1} parent=1 // pred_check_branch
      %76 = sbr.rel (0) target = $region49
    $region48: #{tpu_custom_call.1} parent=1 // pred_region
      %78 = dma.done [#allocation6], 512
    $region49: #{tpu_custom_call.1} parent=1 // pred_fallthru
      _
    // Predicated region
    $region50: #{tpu_custom_call.1} parent=1 // pred_check
      _
    $region51: #{tpu_custom_call.1} parent=1 // pred_check_branch
      %80 = sbr.rel (0) target = $region53
    $region52: #{tpu_custom_call.1} parent=1 // pred_region
      %82 = dma.done [#allocation6], 512
    $region53: #{tpu_custom_call.1} parent=1 // pred_fallthru
      _
    %v83 = vld [vmem:[#allocation2] sm:$0xff]
    %v84 = vld [vmem:[#allocation2 + $0x8] sm:$0xff]
    %v85 = vld [vmem:[#allocation2 + $0x10] sm:$0xff]
    %v86 = vld [vmem:[#allocation2 + $0x18] sm:$0xff]
    %v87 = vld [vmem:[#allocation5] sm:$0xff]
    %v88 = vld [vmem:[#allocation5 + $0x8] sm:$0xff]
    %v89 = vld [vmem:[#allocation5 + $0x10] sm:$0xff]
    %v90 = vld [vmem:[#allocation5 + $0x18] sm:$0xff]
    %v91 = vld [vmem:[#allocation7] sm:$0xff]
    %v92 = vld [vmem:[#allocation7 + $0x8] sm:$0xff]
    %v93 = vld [vmem:[#allocation7 + $0x10] sm:$0xff]
    %v94 = vld [vmem:[#allocation7 + $0x18] sm:$0xff]
    %v95 = vld [vmem:[%s0] sm:$0x3]
    %v96 = vld [vmem:[%s1] sm:$0xff]
    %v97 = vld [vmem:[%s1 + $0x8] sm:$0xff]
    %v98 = vld [vmem:[%s1 + $0x10] sm:$0xff]
    %v99 = vld [vmem:[%s1 + $0x18] sm:$0xff]
    %v100 = vld [vmem:[%s1 + $0x20] sm:$0xff]
    %v101 = vld [vmem:[%s1 + $0x28] sm:$0xff]
    %v102 = vld [vmem:[%s1 + $0x30] sm:$0xff]
    %v103 = vld [vmem:[%s1 + $0x38] sm:$0xff]
    %v104 = vld [vmem:[%s1 + $0x40] sm:$0xff]
    %v105 = vld [vmem:[%s1 + $0x48] sm:$0xff]
    %v106 = vld [vmem:[%s1 + $0x50] sm:$0xff]
    %v107 = vld [vmem:[%s1 + $0x58] sm:$0xff]
    %v108 = vld [vmem:[%s1 + $0x60] sm:$0xff]
    %v109 = vld [vmem:[%s1 + $0x68] sm:$0xff]
    %v110 = vld [vmem:[%s1 + $0x70] sm:$0xff]
    %v111 = vld [vmem:[%s1 + $0x78] sm:$0xff]
    %v112 = vld [vmem:[%s1 + $0x80] sm:$0xff]
    %v113 = vld [vmem:[%s1 + $0x88] sm:$0xff]
    %v114 = vld [vmem:[%s1 + $0x90] sm:$0xff]
    %v115 = vld [vmem:[%s1 + $0x98] sm:$0xff]
    %v116 = vld [vmem:[%s1 + $0xa0] sm:$0xff]
    %v117 = vld [vmem:[%s1 + $0xa8] sm:$0xff]
    %v118 = vld [vmem:[%s1 + $0xb0] sm:$0xff]
    %v119 = vld [vmem:[%s1 + $0xb8] sm:$0xff]
    %v120 = vld [vmem:[%s1 + $0xc0] sm:$0xff]
    %v121 = vld [vmem:[%s1 + $0xc8] sm:$0xff]
    %v122 = vld [vmem:[%s1 + $0xd0] sm:$0xff]
    %v123 = vld [vmem:[%s1 + $0xd8] sm:$0xff]
    %v124 = vld [vmem:[%s1 + $0xe0] sm:$0xff]
    %v125 = vld [vmem:[%s1 + $0xe8] sm:$0xff]
    %v126 = vld [vmem:[%s1 + $0xf0] sm:$0xff]
    %v127 = vld [vmem:[%s1 + $0xf8] sm:$0xff]
    %v128 = vld [vmem:[%s2] sm:$0xff]
    %v130 = vperm.slane %v128, 0
    %v131 = vperm.slane %v128, 1
    %v132 = vperm.slane %v128, 2
    %v133 = vperm.slane %v128, 3
    %v134 = vperm.slane %v128, 4
    %v135 = vperm.slane %v128, 5
    %v136 = vperm.slane %v128, 6
    %v137 = vperm.slane %v128, 7
    %vm146 = vcmask 261120
    %v148 = vsel %vm146, %v95, 0
    %150 = vmatpush.msra.mxu0 0.0
    %151 = vmatpush.msra.mxu0 0.0
    %152 = vmatpush.msra.mxu0 0.0
    %153 = vmatpush.msra.mxu0 0.0
    %154 = vmatpush.msra.mxu0 0.0
    %155 = vmatpush.msra.mxu0 0.0
    %156 = vmatpush.msra.mxu0 0.0
    %157 = vmatpush.msra.mxu0 0.0
    %158 = vmatpush.msra.mxu0 0.0
    %159 = vmatpush.msra.mxu0 0.0
    %160 = vmatpush.msra.mxu0 0.0
    %161 = vmatpush.msra.mxu0 0.0
    %162 = vmatpush.msra.mxu0 %v120
    %163 = vmatpush.msra.mxu0 %v112
    %164 = vmatpush.msra.mxu0 %v104
    %165 = vmatpush.msra.mxu0 %v96
    %166 = vmatmul.f32.gmra.mxu0 %v148
    %v167 = vpop.f32.mrf.mxu0
    %v168 = vadd.f32 %v130, %v167
    %169 = vdwg.mxu0
    %170 = vmatpush.msra.mxu0 0.0
    %171 = vmatpush.msra.mxu0 0.0
    %172 = vmatpush.msra.mxu0 0.0
    %173 = vmatpush.msra.mxu0 0.0
    %174 = vmatpush.msra.mxu0 0.0
    %175 = vmatpush.msra.mxu0 0.0
    %176 = vmatpush.msra.mxu0 0.0
    %177 = vmatpush.msra.mxu0 0.0
    %178 = vmatpush.msra.mxu0 0.0
    %179 = vmatpush.msra.mxu0 0.0
    %180 = vmatpush.msra.mxu0 0.0
    %181 = vmatpush.msra.mxu0 0.0
    %182 = vmatpush.msra.mxu0 %v121
    %183 = vmatpush.msra.mxu0 %v113
    %184 = vmatpush.msra.mxu0 %v105
    %185 = vmatpush.msra.mxu0 %v97
    %186 = vmatmul.f32.gmra.mxu0 %v148
    %v187 = vpop.f32.mrf.mxu0
    %v188 = vadd.f32 %v131, %v187
    %189 = vdwg.mxu0
    %190 = vmatpush.msra.mxu0 0.0
    %191 = vmatpush.msra.mxu0 0.0
    %192 = vmatpush.msra.mxu0 0.0
    %193 = vmatpush.msra.mxu0 0.0
    %194 = vmatpush.msra.mxu0 0.0
    %195 = vmatpush.msra.mxu0 0.0
    %196 = vmatpush.msra.mxu0 0.0
    %197 = vmatpush.msra.mxu0 0.0
    %198 = vmatpush.msra.mxu0 0.0
    %199 = vmatpush.msra.mxu0 0.0
    %200 = vmatpush.msra.mxu0 0.0
    %201 = vmatpush.msra.mxu0 0.0
    %202 = vmatpush.msra.mxu0 %v122
    %203 = vmatpush.msra.mxu0 %v114
    %204 = vmatpush.msra.mxu0 %v106
    %205 = vmatpush.msra.mxu0 %v98
    %206 = vmatmul.f32.gmra.mxu0 %v148
    %v207 = vpop.f32.mrf.mxu0
    %v208 = vadd.f32 %v132, %v207
    %209 = vdwg.mxu0
    %210 = vmatpush.msra.mxu0 0.0
    %211 = vmatpush.msra.mxu0 0.0
    %212 = vmatpush.msra.mxu0 0.0
    %213 = vmatpush.msra.mxu0 0.0
    %214 = vmatpush.msra.mxu0 0.0
    %215 = vmatpush.msra.mxu0 0.0
    %216 = vmatpush.msra.mxu0 0.0
    %217 = vmatpush.msra.mxu0 0.0
    %218 = vmatpush.msra.mxu0 0.0
    %219 = vmatpush.msra.mxu0 0.0
    %220 = vmatpush.msra.mxu0 0.0
    %221 = vmatpush.msra.mxu0 0.0
    %222 = vmatpush.msra.mxu0 %v123
    %223 = vmatpush.msra.mxu0 %v115
    %224 = vmatpush.msra.mxu0 %v107
    %225 = vmatpush.msra.mxu0 %v99
    %226 = vmatmul.f32.gmra.mxu0 %v148
    %v227 = vpop.f32.mrf.mxu0
    %v228 = vadd.f32 %v133, %v227
    %229 = vdwg.mxu0
    %230 = vmatpush.msra.mxu0 0.0
    %231 = vmatpush.msra.mxu0 0.0
    %232 = vmatpush.msra.mxu0 0.0
    %233 = vmatpush.msra.mxu0 0.0
    %234 = vmatpush.msra.mxu0 0.0
    %235 = vmatpush.msra.mxu0 0.0
    %236 = vmatpush.msra.mxu0 0.0
    %237 = vmatpush.msra.mxu0 0.0
    %238 = vmatpush.msra.mxu0 0.0
    %239 = vmatpush.msra.mxu0 0.0
    %240 = vmatpush.msra.mxu0 0.0
    %241 = vmatpush.msra.mxu0 0.0
    %242 = vmatpush.msra.mxu0 %v124
    %243 = vmatpush.msra.mxu0 %v116
    %244 = vmatpush.msra.mxu0 %v108
    %245 = vmatpush.msra.mxu0 %v100
    %246 = vmatmul.f32.gmra.mxu0 %v148
    %v247 = vpop.f32.mrf.mxu0
    %v248 = vadd.f32 %v134, %v247
    %249 = vdwg.mxu0
    %250 = vmatpush.msra.mxu0 0.0
    %251 = vmatpush.msra.mxu0 0.0
    %252 = vmatpush.msra.mxu0 0.0
    %253 = vmatpush.msra.mxu0 0.0
    %254 = vmatpush.msra.mxu0 0.0
    %255 = vmatpush.msra.mxu0 0.0
    %256 = vmatpush.msra.mxu0 0.0
    %257 = vmatpush.msra.mxu0 0.0
    %258 = vmatpush.msra.mxu0 0.0
    %259 = vmatpush.msra.mxu0 0.0
    %260 = vmatpush.msra.mxu0 0.0
    %261 = vmatpush.msra.mxu0 0.0
    %262 = vmatpush.msra.mxu0 %v125
    %263 = vmatpush.msra.mxu0 %v117
    %264 = vmatpush.msra.mxu0 %v109
    %265 = vmatpush.msra.mxu0 %v101
    %266 = vmatmul.f32.gmra.mxu0 %v148
    %v267 = vpop.f32.mrf.mxu0
    %v268 = vadd.f32 %v135, %v267
    %269 = vdwg.mxu0
    %270 = vmatpush.msra.mxu0 0.0
    %271 = vmatpush.msra.mxu0 0.0
    %272 = vmatpush.msra.mxu0 0.0
    %273 = vmatpush.msra.mxu0 0.0
    %274 = vmatpush.msra.mxu0 0.0
    %275 = vmatpush.msra.mxu0 0.0
    %276 = vmatpush.msra.mxu0 0.0
    %277 = vmatpush.msra.mxu0 0.0
    %278 = vmatpush.msra.mxu0 0.0
    %279 = vmatpush.msra.mxu0 0.0
    %280 = vmatpush.msra.mxu0 0.0
    %281 = vmatpush.msra.mxu0 0.0
    %282 = vmatpush.msra.mxu0 %v126
    %283 = vmatpush.msra.mxu0 %v118
    %284 = vmatpush.msra.mxu0 %v110
    %285 = vmatpush.msra.mxu0 %v102
    %286 = vmatmul.f32.gmra.mxu0 %v148
    %v287 = vpop.f32.mrf.mxu0
    %v288 = vadd.f32 %v136, %v287
    %289 = vdwg.mxu0
    %290 = vmatpush.msra.mxu0 0.0
    %291 = vmatpush.msra.mxu0 0.0
    %292 = vmatpush.msra.mxu0 0.0
    %293 = vmatpush.msra.mxu0 0.0
    %294 = vmatpush.msra.mxu0 0.0
    %295 = vmatpush.msra.mxu0 0.0
    %296 = vmatpush.msra.mxu0 0.0
    %297 = vmatpush.msra.mxu0 0.0
    %298 = vmatpush.msra.mxu0 0.0
    %299 = vmatpush.msra.mxu0 0.0
    %300 = vmatpush.msra.mxu0 0.0
    %301 = vmatpush.msra.mxu0 0.0
    %302 = vmatpush.msra.mxu0 %v127
    %303 = vmatpush.msra.mxu0 %v119
    %304 = vmatpush.msra.mxu0 %v111
    %305 = vmatpush.msra.mxu0 %v103
    %306 = vmatmul.f32.gmra.mxu0 %v148
    %v307 = vpop.f32.mrf.mxu0
    %v308 = vadd.f32 %v137, %v307
    %309 = vdwg.mxu0
    %v311 = vsel %vm146, 0.0, 0
    %313 = vmatpush.msra.mxu0 0.0
    %314 = vmatpush.msra.mxu0 0.0
    %315 = vmatpush.msra.mxu0 0.0
    %316 = vmatpush.msra.mxu0 0.0
    %317 = vmatpush.msra.mxu0 0.0
    %318 = vmatpush.msra.mxu0 0.0
    %319 = vmatpush.msra.mxu0 0.0
    %320 = vmatpush.msra.mxu0 0.0
    %321 = vmatpush.msra.mxu0 0.0
    %322 = vmatpush.msra.mxu0 0.0
    %323 = vmatpush.msra.mxu0 0.0
    %324 = vmatpush.msra.mxu0 0.0
    %325 = vmatpush.msra.mxu0 %v86
    %326 = vmatpush.msra.mxu0 %v85
    %327 = vmatpush.msra.mxu0 %v84
    %328 = vmatpush.msra.mxu0 %v83
    %329 = vmatmul.f32.gmra.mxu0 %v311
    %v330 = vpop.f32.mrf.mxu0
    %v331 = vadd.f32 0.0, %v330
    %332 = vdwg.mxu0
    %v333 = vadd.f32 %v168, %v331
    %v334 = vxor.u32 %v333, 2147483648
    %v335 = vmul.f32 %v334, 1.442695
    %v336 = vpow.pop %v335
    %v337 = vadd.f32 %v336, 1.0
    %v338 = vrcp.pop %v337
    %v339 = vmul.f32 %v337, %v338
    %v340 = vsub.f32 1.0, %v339
    %v341 = vmul.f32 %v338, %v340
    %v342 = vadd.f32 %v338, %v341
    %vm343 = vweird.f32 %v337
    %vm344 = vweird.f32 %v338
    %vm345 = vmor %vm343, %vm344
    %v346 = vsel %vm345, %v338, %v342
    %v347 = vand.u32 2147483647, %v337
    %vm348 = vcmp.eq.f32.partialorder %v347, 8.507059e+37
    %v349 = vand.u32 %v337, 2147483648
    %v350 = vor.u32 1.1754944e-38, %v349
    %v351 = vsel %vm348, %v350, %v346
    %v352 = vmul.f32 1.0, %v351
    %v353 = vtanh.pop %v333
    %v354 = vmul.f32 %v352, 0.0
    %356 = vrot.lane.b32.xlu0 %v353, 64
    %v357 = vpop.permute.xlu0 %356
    %v359 = vmul.f32 %v352, %v357
    %361 = vrot.lane.b32.xlu0 %v359, 32
    %v362 = vpop.permute.xlu0 %361
    %v364 = vadd.f32 %v354, %v362
    %v365 = vtanh.pop %v364
    %367 = vrot.lane.b32.xlu0 %v365, 64
    %v368 = vpop.permute.xlu0 %367
    %v370 = vmul.f32 %v352, %v368
    %372 = vrot.lane.b32.xlu0 %v370, 32
    %v373 = vpop.permute.xlu0 %372
    %v374 = vsel %vm146, %v373, 0
    %376 = vmatpush.msra.mxu0 0.0
    %377 = vmatpush.msra.mxu0 0.0
    %378 = vmatpush.msra.mxu0 0.0
    %379 = vmatpush.msra.mxu0 0.0
    %380 = vmatpush.msra.mxu0 0.0
    %381 = vmatpush.msra.mxu0 0.0
    %382 = vmatpush.msra.mxu0 0.0
    %383 = vmatpush.msra.mxu0 0.0
    %384 = vmatpush.msra.mxu0 0.0
    %385 = vmatpush.msra.mxu0 0.0
    %386 = vmatpush.msra.mxu0 0.0
    %387 = vmatpush.msra.mxu0 0.0
    %388 = vmatpush.msra.mxu0 %v86
    %389 = vmatpush.msra.mxu0 %v85
    %390 = vmatpush.msra.mxu0 %v84
    %391 = vmatpush.msra.mxu0 %v83
    %392 = vmatmul.f32.gmra.mxu0 %v374
    %v393 = vpop.f32.mrf.mxu0
    %v394 = vadd.f32 0.0, %v393
    %395 = vdwg.mxu0
    %v396 = vadd.f32 %v188, %v394
    %v397 = vxor.u32 %v396, 2147483648
    %v398 = vmul.f32 %v397, 1.442695
    %v399 = vpow.pop %v398
    %v400 = vadd.f32 %v399, 1.0
    %v401 = vrcp.pop %v400
    %v402 = vmul.f32 %v400, %v401
    %v403 = vsub.f32 1.0, %v402
    %v404 = vmul.f32 %v401, %v403
    %v405 = vadd.f32 %v401, %v404
    %vm406 = vweird.f32 %v400
    %vm407 = vweird.f32 %v401
    %vm408 = vmor %vm406, %vm407
    %v409 = vsel %vm408, %v401, %v405
    %v410 = vand.u32 2147483647, %v400
    %vm411 = vcmp.eq.f32.partialorder %v410, 8.507059e+37
    %v412 = vand.u32 %v400, 2147483648
    %v413 = vor.u32 1.1754944e-38, %v412
    %v414 = vsel %vm411, %v413, %v409
    %v415 = vmul.f32 1.0, %v414
    %v416 = vtanh.pop %v396
    %v417 = vmul.f32 %v415, %v364
    %419 = vrot.lane.b32.xlu0 %v416, 64
    %v420 = vpop.permute.xlu0 %419
    %v422 = vmul.f32 %v415, %v420
    %424 = vrot.lane.b32.xlu0 %v422, 32
    %v425 = vpop.permute.xlu0 %424
    %v427 = vadd.f32 %v417, %v425
    %v428 = vtanh.pop %v427
    %430 = vrot.lane.b32.xlu0 %v428, 64
    %v431 = vpop.permute.xlu0 %430
    %v433 = vmul.f32 %v415, %v431
    %435 = vrot.lane.b32.xlu0 %v433, 32
    %v436 = vpop.permute.xlu0 %435
    %v437 = vsel %vm146, %v436, 0
    %439 = vmatpush.msra.mxu0 0.0
    %440 = vmatpush.msra.mxu0 0.0
    %441 = vmatpush.msra.mxu0 0.0
    %442 = vmatpush.msra.mxu0 0.0
    %443 = vmatpush.msra.mxu0 0.0
    %444 = vmatpush.msra.mxu0 0.0
    %445 = vmatpush.msra.mxu0 0.0
    %446 = vmatpush.msra.mxu0 0.0
    %447 = vmatpush.msra.mxu0 0.0
    %448 = vmatpush.msra.mxu0 0.0
    %449 = vmatpush.msra.mxu0 0.0
    %450 = vmatpush.msra.mxu0 0.0
    %451 = vmatpush.msra.mxu0 %v86
    %452 = vmatpush.msra.mxu0 %v85
    %453 = vmatpush.msra.mxu0 %v84
    %454 = vmatpush.msra.mxu0 %v83
    %455 = vmatmul.f32.gmra.mxu0 %v437
    %v456 = vpop.f32.mrf.mxu0
    %v457 = vadd.f32 0.0, %v456
    %458 = vdwg.mxu0
    %v459 = vadd.f32 %v208, %v457
    %v460 = vxor.u32 %v459, 2147483648
    %v461 = vmul.f32 %v460, 1.442695
    %v462 = vpow.pop %v461
    %v463 = vadd.f32 %v462, 1.0
    %v464 = vrcp.pop %v463
    %v465 = vmul.f32 %v463, %v464
    %v466 = vsub.f32 1.0, %v465
    %v467 = vmul.f32 %v464, %v466
    %v468 = vadd.f32 %v464, %v467
    %vm469 = vweird.f32 %v463
    %vm470 = vweird.f32 %v464
    %vm471 = vmor %vm469, %vm470
    %v472 = vsel %vm471, %v464, %v468
    %v473 = vand.u32 2147483647, %v463
    %vm474 = vcmp.eq.f32.partialorder %v473, 8.507059e+37
    %v475 = vand.u32 %v463, 2147483648
    %v476 = vor.u32 1.1754944e-38, %v475
    %v477 = vsel %vm474, %v476, %v472
    %v478 = vmul.f32 1.0, %v477
    %v479 = vtanh.pop %v459
    %v480 = vmul.f32 %v478, %v427
    %482 = vrot.lane.b32.xlu0 %v479, 64
    %v483 = vpop.permute.xlu0 %482
    %v485 = vmul.f32 %v478, %v483
    %487 = vrot.lane.b32.xlu0 %v485, 32
    %v488 = vpop.permute.xlu0 %487
    %v490 = vadd.f32 %v480, %v488
    %v491 = vtanh.pop %v490
    %493 = vrot.lane.b32.xlu0 %v491, 64
    %v494 = vpop.permute.xlu0 %493
    %v496 = vmul.f32 %v478, %v494
    %498 = vrot.lane.b32.xlu0 %v496, 32
    %v499 = vpop.permute.xlu0 %498
    %v500 = vsel %vm146, %v499, 0
    %502 = vmatpush.msra.mxu0 0.0
    %503 = vmatpush.msra.mxu0 0.0
    %504 = vmatpush.msra.mxu0 0.0
    %505 = vmatpush.msra.mxu0 0.0
    %506 = vmatpush.msra.mxu0 0.0
    %507 = vmatpush.msra.mxu0 0.0
    %508 = vmatpush.msra.mxu0 0.0
    %509 = vmatpush.msra.mxu0 0.0
    %510 = vmatpush.msra.mxu0 0.0
    %511 = vmatpush.msra.mxu0 0.0
    %512 = vmatpush.msra.mxu0 0.0
    %513 = vmatpush.msra.mxu0 0.0
    %514 = vmatpush.msra.mxu0 %v86
    %515 = vmatpush.msra.mxu0 %v85
    %516 = vmatpush.msra.mxu0 %v84
    %517 = vmatpush.msra.mxu0 %v83
    %518 = vmatmul.f32.gmra.mxu0 %v500
    %v519 = vpop.f32.mrf.mxu0
    %v520 = vadd.f32 0.0, %v519
    %521 = vdwg.mxu0
    %v522 = vadd.f32 %v228, %v520
    %v523 = vxor.u32 %v522, 2147483648
    %v524 = vmul.f32 %v523, 1.442695
    %v525 = vpow.pop %v524
    %v526 = vadd.f32 %v525, 1.0
    %v527 = vrcp.pop %v526
    %v528 = vmul.f32 %v526, %v527
    %v529 = vsub.f32 1.0, %v528
    %v530 = vmul.f32 %v527, %v529
    %v531 = vadd.f32 %v527, %v530
    %vm532 = vweird.f32 %v526
    %vm533 = vweird.f32 %v527
    %vm534 = vmor %vm532, %vm533
    %v535 = vsel %vm534, %v527, %v531
    %v536 = vand.u32 2147483647, %v526
    %vm537 = vcmp.eq.f32.partialorder %v536, 8.507059e+37
    %v538 = vand.u32 %v526, 2147483648
    %v539 = vor.u32 1.1754944e-38, %v538
    %v540 = vsel %vm537, %v539, %v535
    %v541 = vmul.f32 1.0, %v540
    %v542 = vtanh.pop %v522
    %v543 = vmul.f32 %v541, %v490
    %545 = vrot.lane.b32.xlu0 %v542, 64
    %v546 = vpop.permute.xlu0 %545
    %v548 = vmul.f32 %v541, %v546
    %550 = vrot.lane.b32.xlu0 %v548, 32
    %v551 = vpop.permute.xlu0 %550
    %v553 = vadd.f32 %v543, %v551
    %v554 = vtanh.pop %v553
    %556 = vrot.lane.b32.xlu0 %v554, 64
    %v557 = vpop.permute.xlu0 %556
    %v559 = vmul.f32 %v541, %v557
    %561 = vrot.lane.b32.xlu0 %v559, 32
    %v562 = vpop.permute.xlu0 %561
    %v563 = vsel %vm146, %v562, 0
    %565 = vmatpush.msra.mxu0 0.0
    %566 = vmatpush.msra.mxu0 0.0
    %567 = vmatpush.msra.mxu0 0.0
    %568 = vmatpush.msra.mxu0 0.0
    %569 = vmatpush.msra.mxu0 0.0
    %570 = vmatpush.msra.mxu0 0.0
    %571 = vmatpush.msra.mxu0 0.0
    %572 = vmatpush.msra.mxu0 0.0
    %573 = vmatpush.msra.mxu0 0.0
    %574 = vmatpush.msra.mxu0 0.0
    %575 = vmatpush.msra.mxu0 0.0
    %576 = vmatpush.msra.mxu0 0.0
    %577 = vmatpush.msra.mxu0 %v86
    %578 = vmatpush.msra.mxu0 %v85
    %579 = vmatpush.msra.mxu0 %v84
    %580 = vmatpush.msra.mxu0 %v83
    %581 = vmatmul.f32.gmra.mxu0 %v563
    %v582 = vpop.f32.mrf.mxu0
    %v583 = vadd.f32 0.0, %v582
    %584 = vdwg.mxu0
    %v585 = vadd.f32 %v248, %v583
    %v586 = vxor.u32 %v585, 2147483648
    %v587 = vmul.f32 %v586, 1.442695
    %v588 = vpow.pop %v587
    %v589 = vadd.f32 %v588, 1.0
    %v590 = vrcp.pop %v589
    %v591 = vmul.f32 %v589, %v590
    %v592 = vsub.f32 1.0, %v591
    %v593 = vmul.f32 %v590, %v592
    %v594 = vadd.f32 %v590, %v593
    %vm595 = vweird.f32 %v589
    %vm596 = vweird.f32 %v590
    %vm597 = vmor %vm595, %vm596
    %v598 = vsel %vm597, %v590, %v594
    %v599 = vand.u32 2147483647, %v589
    %vm600 = vcmp.eq.f32.partialorder %v599, 8.507059e+37
    %v601 = vand.u32 %v589, 2147483648
    %v602 = vor.u32 1.1754944e-38, %v601
    %v603 = vsel %vm600, %v602, %v598
    %v604 = vmul.f32 1.0, %v603
    %v605 = vtanh.pop %v585
    %v606 = vmul.f32 %v604, %v553
    %608 = vrot.lane.b32.xlu0 %v605, 64
    %v609 = vpop.permute.xlu0 %608
    %v611 = vmul.f32 %v604, %v609
    %613 = vrot.lane.b32.xlu0 %v611, 32
    %v614 = vpop.permute.xlu0 %613
    %v616 = vadd.f32 %v606, %v614
    %v617 = vtanh.pop %v616
    %619 = vrot.lane.b32.xlu0 %v617, 64
    %v620 = vpop.permute.xlu0 %619
    %v622 = vmul.f32 %v604, %v620
    %624 = vrot.lane.b32.xlu0 %v622, 32
    %v625 = vpop.permute.xlu0 %624
    %v626 = vsel %vm146, %v625, 0
    %628 = vmatpush.msra.mxu0 0.0
    %629 = vmatpush.msra.mxu0 0.0
    %630 = vmatpush.msra.mxu0 0.0
    %631 = vmatpush.msra.mxu0 0.0
    %632 = vmatpush.msra.mxu0 0.0
    %633 = vmatpush.msra.mxu0 0.0
    %634 = vmatpush.msra.mxu0 0.0
    %635 = vmatpush.msra.mxu0 0.0
    %636 = vmatpush.msra.mxu0 0.0
    %637 = vmatpush.msra.mxu0 0.0
    %638 = vmatpush.msra.mxu0 0.0
    %639 = vmatpush.msra.mxu0 0.0
    %640 = vmatpush.msra.mxu0 %v86
    %641 = vmatpush.msra.mxu0 %v85
    %642 = vmatpush.msra.mxu0 %v84
    %643 = vmatpush.msra.mxu0 %v83
    %644 = vmatmul.f32.gmra.mxu0 %v626
    %v645 = vpop.f32.mrf.mxu0
    %v646 = vadd.f32 0.0, %v645
    %647 = vdwg.mxu0
    %v648 = vadd.f32 %v268, %v646
    %v649 = vxor.u32 %v648, 2147483648
    %v650 = vmul.f32 %v649, 1.442695
    %v651 = vpow.pop %v650
    %v652 = vadd.f32 %v651, 1.0
    %v653 = vrcp.pop %v652
    %v654 = vmul.f32 %v652, %v653
    %v655 = vsub.f32 1.0, %v654
    %v656 = vmul.f32 %v653, %v655
    %v657 = vadd.f32 %v653, %v656
    %vm658 = vweird.f32 %v652
    %vm659 = vweird.f32 %v653
    %vm660 = vmor %vm658, %vm659
    %v661 = vsel %vm660, %v653, %v657
    %v662 = vand.u32 2147483647, %v652
    %vm663 = vcmp.eq.f32.partialorder %v662, 8.507059e+37
    %v664 = vand.u32 %v652, 2147483648
    %v665 = vor.u32 1.1754944e-38, %v664
    %v666 = vsel %vm663, %v665, %v661
    %v667 = vmul.f32 1.0, %v666
    %v668 = vtanh.pop %v648
    %v669 = vmul.f32 %v667, %v616
    %671 = vrot.lane.b32.xlu0 %v668, 64
    %v672 = vpop.permute.xlu0 %671
    %v674 = vmul.f32 %v667, %v672
    %676 = vrot.lane.b32.xlu0 %v674, 32
    %v677 = vpop.permute.xlu0 %676
    %v679 = vadd.f32 %v669, %v677
    %v680 = vtanh.pop %v679
    %682 = vrot.lane.b32.xlu0 %v680, 64
    %v683 = vpop.permute.xlu0 %682
    %v685 = vmul.f32 %v667, %v683
    %687 = vrot.lane.b32.xlu0 %v685, 32
    %v688 = vpop.permute.xlu0 %687
    %v689 = vsel %vm146, %v688, 0
    %691 = vmatpush.msra.mxu0 0.0
    %692 = vmatpush.msra.mxu0 0.0
    %693 = vmatpush.msra.mxu0 0.0
    %694 = vmatpush.msra.mxu0 0.0
    %695 = vmatpush.msra.mxu0 0.0
    %696 = vmatpush.msra.mxu0 0.0
    %697 = vmatpush.msra.mxu0 0.0
    %698 = vmatpush.msra.mxu0 0.0
    %699 = vmatpush.msra.mxu0 0.0
    %700 = vmatpush.msra.mxu0 0.0
    %701 = vmatpush.msra.mxu0 0.0
    %702 = vmatpush.msra.mxu0 0.0
    %703 = vmatpush.msra.mxu0 %v86
    %704 = vmatpush.msra.mxu0 %v85
    %705 = vmatpush.msra.mxu0 %v84
    %706 = vmatpush.msra.mxu0 %v83
    %707 = vmatmul.f32.gmra.mxu0 %v689
    %v708 = vpop.f32.mrf.mxu0
    %v709 = vadd.f32 0.0, %v708
    %710 = vdwg.mxu0
    %v711 = vadd.f32 %v288, %v709
    %v712 = vxor.u32 %v711, 2147483648
    %v713 = vmul.f32 %v712, 1.442695
    %v714 = vpow.pop %v713
    %v715 = vadd.f32 %v714, 1.0
    %v716 = vrcp.pop %v715
    %v717 = vmul.f32 %v715, %v716
    %v718 = vsub.f32 1.0, %v717
    %v719 = vmul.f32 %v716, %v718
    %v720 = vadd.f32 %v716, %v719
    %vm721 = vweird.f32 %v715
    %vm722 = vweird.f32 %v716
    %vm723 = vmor %vm721, %vm722
    %v724 = vsel %vm723, %v716, %v720
    %v725 = vand.u32 2147483647, %v715
    %vm726 = vcmp.eq.f32.partialorder %v725, 8.507059e+37
    %v727 = vand.u32 %v715, 2147483648
    %v728 = vor.u32 1.1754944e-38, %v727
    %v729 = vsel %vm726, %v728, %v724
    %v730 = vmul.f32 1.0, %v729
    %v731 = vtanh.pop %v711
    %v732 = vmul.f32 %v730, %v679
    %734 = vrot.lane.b32.xlu0 %v731, 64
    %v735 = vpop.permute.xlu0 %734
    %v737 = vmul.f32 %v730, %v735
    %739 = vrot.lane.b32.xlu0 %v737, 32
    %v740 = vpop.permute.xlu0 %739
    %v742 = vadd.f32 %v732, %v740
    %v743 = vtanh.pop %v742
    %745 = vrot.lane.b32.xlu0 %v743, 64
    %v746 = vpop.permute.xlu0 %745
    %v748 = vmul.f32 %v730, %v746
    %750 = vrot.lane.b32.xlu0 %v748, 32
    %v751 = vpop.permute.xlu0 %750
    %v752 = vsel %vm146, %v751, 0
    %754 = vmatpush.msra.mxu0 0.0
    %755 = vmatpush.msra.mxu0 0.0
    %756 = vmatpush.msra.mxu0 0.0
    %757 = vmatpush.msra.mxu0 0.0
    %758 = vmatpush.msra.mxu0 0.0
    %759 = vmatpush.msra.mxu0 0.0
    %760 = vmatpush.msra.mxu0 0.0
    %761 = vmatpush.msra.mxu0 0.0
    %762 = vmatpush.msra.mxu0 0.0
    %763 = vmatpush.msra.mxu0 0.0
    %764 = vmatpush.msra.mxu0 0.0
    %765 = vmatpush.msra.mxu0 0.0
    %766 = vmatpush.msra.mxu0 %v86
    %767 = vmatpush.msra.mxu0 %v85
    %768 = vmatpush.msra.mxu0 %v84
    %769 = vmatpush.msra.mxu0 %v83
    %770 = vmatmul.f32.gmra.mxu0 %v752
    %v771 = vpop.f32.mrf.mxu0
    %v772 = vadd.f32 0.0, %v771
    %773 = vdwg.mxu0
    %v774 = vadd.f32 %v308, %v772
    %v775 = vxor.u32 %v774, 2147483648
    %v776 = vmul.f32 %v775, 1.442695
    %v777 = vpow.pop %v776
    %v778 = vadd.f32 %v777, 1.0
    %v779 = vrcp.pop %v778
    %v780 = vmul.f32 %v778, %v779
    %v781 = vsub.f32 1.0, %v780
    %v782 = vmul.f32 %v779, %v781
    %v783 = vadd.f32 %v779, %v782
    %vm784 = vweird.f32 %v778
    %vm785 = vweird.f32 %v779
    %vm786 = vmor %vm784, %vm785
    %v787 = vsel %vm786, %v779, %v783
    %v788 = vand.u32 2147483647, %v778
    %vm789 = vcmp.eq.f32.partialorder %v788, 8.507059e+37
    %v790 = vand.u32 %v778, 2147483648
    %v791 = vor.u32 1.1754944e-38, %v790
    %v792 = vsel %vm789, %v791, %v787
    %v793 = vmul.f32 1.0, %v792
    %v794 = vtanh.pop %v774
    %v795 = vmul.f32 %v793, %v742
    %797 = vrot.lane.b32.xlu0 %v794, 64
    %v798 = vpop.permute.xlu0 %797
    %v800 = vmul.f32 %v793, %v798
    %802 = vrot.lane.b32.xlu0 %v800, 32
    %v803 = vpop.permute.xlu0 %802
    %v805 = vadd.f32 %v795, %v803
    %v806 = vtanh.pop %v805
    %808 = vrot.lane.b32.xlu0 %v806, 64
    %v809 = vpop.permute.xlu0 %808
    %v811 = vmul.f32 %v793, %v809
    %v812 = vld [vmem:[%s5] sm:$0x1]
    %v814 = vperm.slane %v812, 0
    %817 = vrot.lane.b32.xlu0 %v811, 32
    %v818 = vpop.permute.xlu0 %817
    %v819 = vsel %vm146, %v818, 0
    %821 = vmatpush.msra.mxu0 0.0
    %822 = vmatpush.msra.mxu0 0.0
    %823 = vmatpush.msra.mxu0 0.0
    %824 = vmatpush.msra.mxu0 0.0
    %825 = vmatpush.msra.mxu0 0.0
    %826 = vmatpush.msra.mxu0 0.0
    %827 = vmatpush.msra.mxu0 0.0
    %828 = vmatpush.msra.mxu0 0.0
    %829 = vmatpush.msra.mxu0 0.0
    %830 = vmatpush.msra.mxu0 0.0
    %831 = vmatpush.msra.mxu0 0.0
    %832 = vmatpush.msra.mxu0 0.0
    %833 = vmatpush.msra.mxu0 %v90
    %834 = vmatpush.msra.mxu0 %v89
    %835 = vmatpush.msra.mxu0 %v88
    %836 = vmatpush.msra.mxu0 %v87
    %837 = vmatmul.f32.gmra.mxu0 %v819
    %v838 = vpop.f32.mrf.mxu0
    %v839 = vadd.f32 %v814, %v838
    %840 = vdwg.mxu0
    %v841 = vxor.u32 %v839, 2147483648
    %v842 = vmul.f32 %v841, 1.442695
    %v843 = vpow.pop %v842
    %v844 = vadd.f32 %v843, 1.0
    %v845 = vrcp.pop %v844
    %v846 = vmul.f32 %v844, %v845
    %v847 = vsub.f32 1.0, %v846
    %v848 = vmul.f32 %v845, %v847
    %v849 = vadd.f32 %v845, %v848
    %vm850 = vweird.f32 %v844
    %vm851 = vweird.f32 %v845
    %vm852 = vmor %vm850, %vm851
    %v853 = vsel %vm852, %v845, %v849
    %v854 = vand.u32 2147483647, %v844
    %vm855 = vcmp.eq.f32.partialorder %v854, 8.507059e+37
    %v856 = vand.u32 %v844, 2147483648
    %v857 = vor.u32 1.1754944e-38, %v856
    %v858 = vsel %vm855, %v857, %v853
    %v859 = vmul.f32 1.0, %v858
    %v860 = vtanh.pop %v839
    %v861 = vmul.f32 %v859, %v805
    %863 = vrot.lane.b32.xlu0 %v860, 64
    %v864 = vpop.permute.xlu0 %863
    %v866 = vmul.f32 %v859, %v864
    %868 = vrot.lane.b32.xlu0 %v866, 32
    %v869 = vpop.permute.xlu0 %868
    %v871 = vadd.f32 %v861, %v869
    %v872 = vtanh.pop %v871
    %874 = vrot.lane.b32.xlu0 %v872, 64
    %v875 = vpop.permute.xlu0 %874
    %v877 = vmul.f32 %v859, %v875
    %v878 = vld [vmem:[%s7] sm:$0x1]
    %v880 = vperm.slane %v878, 0
    %883 = vrot.lane.b32.xlu0 %v877, 32
    %v884 = vpop.permute.xlu0 %883
    %v885 = vsel %vm146, %v884, 0
    %887 = vmatpush.msra.mxu0 0.0
    %888 = vmatpush.msra.mxu0 0.0
    %889 = vmatpush.msra.mxu0 0.0
    %890 = vmatpush.msra.mxu0 0.0
    %891 = vmatpush.msra.mxu0 0.0
    %892 = vmatpush.msra.mxu0 0.0
    %893 = vmatpush.msra.mxu0 0.0
    %894 = vmatpush.msra.mxu0 0.0
    %895 = vmatpush.msra.mxu0 0.0
    %896 = vmatpush.msra.mxu0 0.0
    %897 = vmatpush.msra.mxu0 0.0
    %898 = vmatpush.msra.mxu0 0.0
    %899 = vmatpush.msra.mxu0 %v94
    %900 = vmatpush.msra.mxu0 %v93
    %901 = vmatpush.msra.mxu0 %v92
    %902 = vmatpush.msra.mxu0 %v91
    %903 = vmatmul.f32.gmra.mxu0 %v885
    %v904 = vpop.f32.mrf.mxu0
    %v905 = vadd.f32 %v880, %v904
    %906 = vdwg.mxu0
    %v907 = vxor.u32 %v905, 2147483648
    %v908 = vmul.f32 %v907, 1.442695
    %v909 = vpow.pop %v908
    %v910 = vadd.f32 %v909, 1.0
    %v911 = vrcp.pop %v910
    %v912 = vmul.f32 %v910, %v911
    %v913 = vsub.f32 1.0, %v912
    %v914 = vmul.f32 %v911, %v913
    %v915 = vadd.f32 %v911, %v914
    %vm916 = vweird.f32 %v910
    %vm917 = vweird.f32 %v911
    %vm918 = vmor %vm916, %vm917
    %v919 = vsel %vm918, %v911, %v915
    %v920 = vand.u32 2147483647, %v910
    %vm921 = vcmp.eq.f32.partialorder %v920, 8.507059e+37
    %v922 = vand.u32 %v910, 2147483648
    %v923 = vor.u32 1.1754944e-38, %v922
    %v924 = vsel %vm921, %v923, %v919
    %v925 = vmul.f32 1.0, %v924
    %v926 = vtanh.pop %v905
    %v927 = vmul.f32 %v925, %v871
    %929 = vrot.lane.b32.xlu0 %v926, 64
    %v930 = vpop.permute.xlu0 %929
    %v932 = vmul.f32 %v925, %v930
    %934 = vrot.lane.b32.xlu0 %v932, 32
    %v935 = vpop.permute.xlu0 %934
    %v937 = vadd.f32 %v927, %v935
    %v938 = vtanh.pop %v937
    %940 = vrot.lane.b32.xlu0 %v938, 64
    %v941 = vpop.permute.xlu0 %940
    %v943 = vmul.f32 %v925, %v941
    %945 = vrot.lane.b32.xlu0 %v943, 32
    %v946 = vpop.permute.xlu0 %945
    %v947 = vsel %vm146, %v946, 0
    %949 = vmatpush.msra.mxu0 0.0
    %950 = vmatpush.msra.mxu0 0.0
    %951 = vmatpush.msra.mxu0 0.0
    %952 = vmatpush.msra.mxu0 0.0
    %953 = vmatpush.msra.mxu0 0.0
    %954 = vmatpush.msra.mxu0 0.0
    %955 = vmatpush.msra.mxu0 0.0
    %956 = vmatpush.msra.mxu0 0.0
    %957 = vmatpush.msra.mxu0 0.0
    %958 = vmatpush.msra.mxu0 0.0
    %959 = vmatpush.msra.mxu0 0.0
    %960 = vmatpush.msra.mxu0 0.0
    %961 = vmatpush.msra.mxu0 %v94
    %962 = vmatpush.msra.mxu0 %v93
    %963 = vmatpush.msra.mxu0 %v92
    %964 = vmatpush.msra.mxu0 %v91
    %965 = vmatmul.f32.gmra.mxu0 %v947
    %v966 = vpop.f32.mrf.mxu0
    %v967 = vadd.f32 %v880, %v966
    %968 = vdwg.mxu0
    %v969 = vxor.u32 %v967, 2147483648
    %v970 = vmul.f32 %v969, 1.442695
    %v971 = vpow.pop %v970
    %v972 = vadd.f32 %v971, 1.0
    %v973 = vrcp.pop %v972
    %v974 = vmul.f32 %v972, %v973
    %v975 = vsub.f32 1.0, %v974
    %v976 = vmul.f32 %v973, %v975
    %v977 = vadd.f32 %v973, %v976
    %vm978 = vweird.f32 %v972
    %vm979 = vweird.f32 %v973
    %vm980 = vmor %vm978, %vm979
    %v981 = vsel %vm980, %v973, %v977
    %v982 = vand.u32 2147483647, %v972
    %vm983 = vcmp.eq.f32.partialorder %v982, 8.507059e+37
    %v984 = vand.u32 %v972, 2147483648
    %v985 = vor.u32 1.1754944e-38, %v984
    %v986 = vsel %vm983, %v985, %v981
    %v987 = vmul.f32 1.0, %v986
    %v988 = vtanh.pop %v967
    %v989 = vmul.f32 %v987, %v937
    %991 = vrot.lane.b32.xlu0 %v988, 64
    %v992 = vpop.permute.xlu0 %991
    %v994 = vmul.f32 %v987, %v992
    %996 = vrot.lane.b32.xlu0 %v994, 32
    %v997 = vpop.permute.xlu0 %996
    %v999 = vadd.f32 %v989, %v997
    %v1000 = vtanh.pop %v999
    %1002 = vrot.lane.b32.xlu0 %v1000, 64
    %v1003 = vpop.permute.xlu0 %1002
    %v1005 = vmul.f32 %v987, %v1003
    %1007 = vrot.lane.b32.xlu0 %v1005, 32
    %v1008 = vpop.permute.xlu0 %1007
    %v1009 = vsel %vm146, %v1008, 0
    %1011 = vmatpush.msra.mxu0 0.0
    %1012 = vmatpush.msra.mxu0 0.0
    %1013 = vmatpush.msra.mxu0 0.0
    %1014 = vmatpush.msra.mxu0 0.0
    %1015 = vmatpush.msra.mxu0 0.0
    %1016 = vmatpush.msra.mxu0 0.0
    %1017 = vmatpush.msra.mxu0 0.0
    %1018 = vmatpush.msra.mxu0 0.0
    %1019 = vmatpush.msra.mxu0 0.0
    %1020 = vmatpush.msra.mxu0 0.0
    %1021 = vmatpush.msra.mxu0 0.0
    %1022 = vmatpush.msra.mxu0 0.0
    %1023 = vmatpush.msra.mxu0 %v94
    %1024 = vmatpush.msra.mxu0 %v93
    %1025 = vmatpush.msra.mxu0 %v92
    %1026 = vmatpush.msra.mxu0 %v91
    %1027 = vmatmul.f32.gmra.mxu0 %v1009
    %v1028 = vpop.f32.mrf.mxu0
    %v1029 = vadd.f32 %v880, %v1028
    %1030 = vdwg.mxu0
    %v1031 = vxor.u32 %v1029, 2147483648
    %v1032 = vmul.f32 %v1031, 1.442695
    %v1033 = vpow.pop %v1032
    %v1034 = vadd.f32 %v1033, 1.0
    %v1035 = vrcp.pop %v1034
    %v1036 = vmul.f32 %v1034, %v1035
    %v1037 = vsub.f32 1.0, %v1036
    %v1038 = vmul.f32 %v1035, %v1037
    %v1039 = vadd.f32 %v1035, %v1038
    %vm1040 = vweird.f32 %v1034
    %vm1041 = vweird.f32 %v1035
    %vm1042 = vmor %vm1040, %vm1041
    %v1043 = vsel %vm1042, %v1035, %v1039
    %v1044 = vand.u32 2147483647, %v1034
    %vm1045 = vcmp.eq.f32.partialorder %v1044, 8.507059e+37
    %v1046 = vand.u32 %v1034, 2147483648
    %v1047 = vor.u32 1.1754944e-38, %v1046
    %v1048 = vsel %vm1045, %v1047, %v1043
    %v1049 = vmul.f32 1.0, %v1048
    %v1050 = vtanh.pop %v1029
    %v1051 = vmul.f32 %v1049, %v999
    %1053 = vrot.lane.b32.xlu0 %v1050, 64
    %v1054 = vpop.permute.xlu0 %1053
    %v1056 = vmul.f32 %v1049, %v1054
    %1058 = vrot.lane.b32.xlu0 %v1056, 32
    %v1059 = vpop.permute.xlu0 %1058
    %v1061 = vadd.f32 %v1051, %v1059
    %v1062 = vtanh.pop %v1061
    %1064 = vrot.lane.b32.xlu0 %v1062, 64
    %v1065 = vpop.permute.xlu0 %1064
    %v1067 = vmul.f32 %v1049, %v1065
    %1069 = vrot.lane.b32.xlu0 %v1067, 32
    %v1070 = vpop.permute.xlu0 %1069
    %v1071 = vsel %vm146, %v1070, 0
    %1073 = vmatpush.msra.mxu0 0.0
    %1074 = vmatpush.msra.mxu0 0.0
    %1075 = vmatpush.msra.mxu0 0.0
    %1076 = vmatpush.msra.mxu0 0.0
    %1077 = vmatpush.msra.mxu0 0.0
    %1078 = vmatpush.msra.mxu0 0.0
    %1079 = vmatpush.msra.mxu0 0.0
    %1080 = vmatpush.msra.mxu0 0.0
    %1081 = vmatpush.msra.mxu0 0.0
    %1082 = vmatpush.msra.mxu0 0.0
    %1083 = vmatpush.msra.mxu0 0.0
    %1084 = vmatpush.msra.mxu0 0.0
    %1085 = vmatpush.msra.mxu0 %v94
    %1086 = vmatpush.msra.mxu0 %v93
    %1087 = vmatpush.msra.mxu0 %v92
    %1088 = vmatpush.msra.mxu0 %v91
    %1089 = vmatmul.f32.gmra.mxu0 %v1071
    %v1090 = vpop.f32.mrf.mxu0
    %v1091 = vadd.f32 %v880, %v1090
    %1092 = vdwg.mxu0
    %v1093 = vxor.u32 %v1091, 2147483648
    %v1094 = vmul.f32 %v1093, 1.442695
    %v1095 = vpow.pop %v1094
    %v1096 = vadd.f32 %v1095, 1.0
    %v1097 = vrcp.pop %v1096
    %v1098 = vmul.f32 %v1096, %v1097
    %v1099 = vsub.f32 1.0, %v1098
    %v1100 = vmul.f32 %v1097, %v1099
    %v1101 = vadd.f32 %v1097, %v1100
    %vm1102 = vweird.f32 %v1096
    %vm1103 = vweird.f32 %v1097
    %vm1104 = vmor %vm1102, %vm1103
    %v1105 = vsel %vm1104, %v1097, %v1101
    %v1106 = vand.u32 2147483647, %v1096
    %vm1107 = vcmp.eq.f32.partialorder %v1106, 8.507059e+37
    %v1108 = vand.u32 %v1096, 2147483648
    %v1109 = vor.u32 1.1754944e-38, %v1108
    %v1110 = vsel %vm1107, %v1109, %v1105
    %v1111 = vmul.f32 1.0, %v1110
    %v1112 = vtanh.pop %v1091
    %v1113 = vmul.f32 %v1111, %v1061
    %1115 = vrot.lane.b32.xlu0 %v1112, 64
    %v1116 = vpop.permute.xlu0 %1115
    %v1118 = vmul.f32 %v1111, %v1116
    %1120 = vrot.lane.b32.xlu0 %v1118, 32
    %v1121 = vpop.permute.xlu0 %1120
    %v1123 = vadd.f32 %v1113, %v1121
    %v1124 = vtanh.pop %v1123
    %1126 = vrot.lane.b32.xlu0 %v1124, 64
    %v1127 = vpop.permute.xlu0 %1126
    %v1129 = vmul.f32 %v1111, %v1127
    %1131 = vrot.lane.b32.xlu0 %v1129, 32
    %v1132 = vpop.permute.xlu0 %1131
    %v1133 = vsel %vm146, %v1132, 0
    %1135 = vmatpush.msra.mxu0 0.0
    %1136 = vmatpush.msra.mxu0 0.0
    %1137 = vmatpush.msra.mxu0 0.0
    %1138 = vmatpush.msra.mxu0 0.0
    %1139 = vmatpush.msra.mxu0 0.0
    %1140 = vmatpush.msra.mxu0 0.0
    %1141 = vmatpush.msra.mxu0 0.0
    %1142 = vmatpush.msra.mxu0 0.0
    %1143 = vmatpush.msra.mxu0 0.0
    %1144 = vmatpush.msra.mxu0 0.0
    %1145 = vmatpush.msra.mxu0 0.0
    %1146 = vmatpush.msra.mxu0 0.0
    %1147 = vmatpush.msra.mxu0 %v94
    %1148 = vmatpush.msra.mxu0 %v93
    %1149 = vmatpush.msra.mxu0 %v92
    %1150 = vmatpush.msra.mxu0 %v91
    %1151 = vmatmul.f32.gmra.mxu0 %v1133
    %v1152 = vpop.f32.mrf.mxu0
    %v1153 = vadd.f32 %v880, %v1152
    %1154 = vdwg.mxu0
    %v1155 = vxor.u32 %v1153, 2147483648
    %v1156 = vmul.f32 %v1155, 1.442695
    %v1157 = vpow.pop %v1156
    %v1158 = vadd.f32 %v1157, 1.0
    %v1159 = vrcp.pop %v1158
    %v1160 = vmul.f32 %v1158, %v1159
    %v1161 = vsub.f32 1.0, %v1160
    %v1162 = vmul.f32 %v1159, %v1161
    %v1163 = vadd.f32 %v1159, %v1162
    %vm1164 = vweird.f32 %v1158
    %vm1165 = vweird.f32 %v1159
    %vm1166 = vmor %vm1164, %vm1165
    %v1167 = vsel %vm1166, %v1159, %v1163
    %v1168 = vand.u32 2147483647, %v1158
    %vm1169 = vcmp.eq.f32.partialorder %v1168, 8.507059e+37
    %v1170 = vand.u32 %v1158, 2147483648
    %v1171 = vor.u32 1.1754944e-38, %v1170
    %v1172 = vsel %vm1169, %v1171, %v1167
    %v1173 = vmul.f32 1.0, %v1172
    %v1174 = vtanh.pop %v1153
    %v1175 = vmul.f32 %v1173, %v1123
    %1177 = vrot.lane.b32.xlu0 %v1174, 64
    %v1178 = vpop.permute.xlu0 %1177
    %v1180 = vmul.f32 %v1173, %v1178
    %1182 = vrot.lane.b32.xlu0 %v1180, 32
    %v1183 = vpop.permute.xlu0 %1182
    %v1185 = vadd.f32 %v1175, %v1183
    %v1186 = vtanh.pop %v1185
    %1188 = vrot.lane.b32.xlu0 %v1186, 64
    %v1189 = vpop.permute.xlu0 %1188
    %v1191 = vmul.f32 %v1173, %v1189
    %1193 = vrot.lane.b32.xlu0 %v1191, 32
    %v1194 = vpop.permute.xlu0 %1193
    %v1195 = vsel %vm146, %v1194, 0
    %1197 = vmatpush.msra.mxu0 0.0
    %1198 = vmatpush.msra.mxu0 0.0
    %1199 = vmatpush.msra.mxu0 0.0
    %1200 = vmatpush.msra.mxu0 0.0
    %1201 = vmatpush.msra.mxu0 0.0
    %1202 = vmatpush.msra.mxu0 0.0
    %1203 = vmatpush.msra.mxu0 0.0
    %1204 = vmatpush.msra.mxu0 0.0
    %1205 = vmatpush.msra.mxu0 0.0
    %1206 = vmatpush.msra.mxu0 0.0
    %1207 = vmatpush.msra.mxu0 0.0
    %1208 = vmatpush.msra.mxu0 0.0
    %1209 = vmatpush.msra.mxu0 %v94
    %1210 = vmatpush.msra.mxu0 %v93
    %1211 = vmatpush.msra.mxu0 %v92
    %1212 = vmatpush.msra.mxu0 %v91
    %1213 = vmatmul.f32.gmra.mxu0 %v1195
    %v1214 = vpop.f32.mrf.mxu0
    %v1215 = vadd.f32 %v880, %v1214
    %1216 = vdwg.mxu0
    %v1217 = vxor.u32 %v1215, 2147483648
    %v1218 = vmul.f32 %v1217, 1.442695
    %v1219 = vpow.pop %v1218
    %v1220 = vadd.f32 %v1219, 1.0
    %v1221 = vrcp.pop %v1220
    %v1222 = vmul.f32 %v1220, %v1221
    %v1223 = vsub.f32 1.0, %v1222
    %v1224 = vmul.f32 %v1221, %v1223
    %v1225 = vadd.f32 %v1221, %v1224
    %vm1226 = vweird.f32 %v1220
    %vm1227 = vweird.f32 %v1221
    %vm1228 = vmor %vm1226, %vm1227
    %v1229 = vsel %vm1228, %v1221, %v1225
    %v1230 = vand.u32 2147483647, %v1220
    %vm1231 = vcmp.eq.f32.partialorder %v1230, 8.507059e+37
    %v1232 = vand.u32 %v1220, 2147483648
    %v1233 = vor.u32 1.1754944e-38, %v1232
    %v1234 = vsel %vm1231, %v1233, %v1229
    %v1235 = vmul.f32 1.0, %v1234
    %v1236 = vtanh.pop %v1215
    %v1237 = vmul.f32 %v1235, %v1185
    %1239 = vrot.lane.b32.xlu0 %v1236, 64
    %v1240 = vpop.permute.xlu0 %1239
    %v1242 = vmul.f32 %v1235, %v1240
    %1244 = vrot.lane.b32.xlu0 %v1242, 32
    %v1245 = vpop.permute.xlu0 %1244
    %v1247 = vadd.f32 %v1237, %v1245
    %v1248 = vtanh.pop %v1247
    %1250 = vrot.lane.b32.xlu0 %v1248, 64
    %v1251 = vpop.permute.xlu0 %1250
    %v1253 = vmul.f32 %v1235, %v1251
    %1255 = vrot.lane.b32.xlu0 %v1253, 32
    %v1256 = vpop.permute.xlu0 %1255
    %v1257 = vsel %vm146, %v1256, 0
    %1259 = vmatpush.msra.mxu0 0.0
    %1260 = vmatpush.msra.mxu0 0.0
    %1261 = vmatpush.msra.mxu0 0.0
    %1262 = vmatpush.msra.mxu0 0.0
    %1263 = vmatpush.msra.mxu0 0.0
    %1264 = vmatpush.msra.mxu0 0.0
    %1265 = vmatpush.msra.mxu0 0.0
    %1266 = vmatpush.msra.mxu0 0.0
    %1267 = vmatpush.msra.mxu0 0.0
    %1268 = vmatpush.msra.mxu0 0.0
    %1269 = vmatpush.msra.mxu0 0.0
    %1270 = vmatpush.msra.mxu0 0.0
    %1271 = vmatpush.msra.mxu0 %v94
    %1272 = vmatpush.msra.mxu0 %v93
    %1273 = vmatpush.msra.mxu0 %v92
    %1274 = vmatpush.msra.mxu0 %v91
    %1275 = vmatmul.f32.gmra.mxu0 %v1257
    %v1276 = vpop.f32.mrf.mxu0
    %v1277 = vadd.f32 %v880, %v1276
    %1278 = vdwg.mxu0
    %v1279 = vxor.u32 %v1277, 2147483648
    %v1280 = vmul.f32 %v1279, 1.442695
    %v1281 = vpow.pop %v1280
    %v1282 = vadd.f32 %v1281, 1.0
    %v1283 = vrcp.pop %v1282
    %v1284 = vmul.f32 %v1282, %v1283
    %v1285 = vsub.f32 1.0, %v1284
    %v1286 = vmul.f32 %v1283, %v1285
    %v1287 = vadd.f32 %v1283, %v1286
    %vm1288 = vweird.f32 %v1282
    %vm1289 = vweird.f32 %v1283
    %vm1290 = vmor %vm1288, %vm1289
    %v1291 = vsel %vm1290, %v1283, %v1287
    %v1292 = vand.u32 2147483647, %v1282
    %vm1293 = vcmp.eq.f32.partialorder %v1292, 8.507059e+37
    %v1294 = vand.u32 %v1282, 2147483648
    %v1295 = vor.u32 1.1754944e-38, %v1294
    %v1296 = vsel %vm1293, %v1295, %v1291
    %v1297 = vmul.f32 1.0, %v1296
    %v1298 = vtanh.pop %v1277
    %v1299 = vmul.f32 %v1297, %v1247
    %1301 = vrot.lane.b32.xlu0 %v1298, 64
    %v1302 = vpop.permute.xlu0 %1301
    %v1304 = vmul.f32 %v1297, %v1302
    %1306 = vrot.lane.b32.xlu0 %v1304, 32
    %v1307 = vpop.permute.xlu0 %1306
    %v1309 = vadd.f32 %v1299, %v1307
    %v1310 = vtanh.pop %v1309
    %1312 = vrot.lane.b32.xlu0 %v1310, 64
    %v1313 = vpop.permute.xlu0 %1312
    %v1315 = vmul.f32 %v1297, %v1313
    %1317 = vrot.lane.b32.xlu0 %v943, 64
    %v1318 = vpop.permute.xlu0 %1317
    %1320 = vrot.lane.b32.xlu0 %v1005, 96
    %v1321 = vpop.permute.xlu0 %1320
    %1324 = vrot.lane.b32.xlu0 %v1191, 64
    %v1325 = vpop.permute.xlu0 %1324
    %1327 = vrot.lane.b32.xlu0 %v1253, 96
    %v1328 = vpop.permute.xlu0 %1327
    %v1330 = vsel %vm146, %v884, %v1318
    %vm1331 = vcmask 523264
    %v1332 = vsel %vm1331, %v1330, %v1321
    %vm1333 = vcmask 785408
    %v1334 = vsel %vm1333, %v1332, %v1067
    %v1335 = vsel %vm146, %v1132, %v1325
    %v1336 = vsel %vm1331, %v1335, %v1328
    %v1337 = vsel %vm1333, %v1336, %v1315
    %v1338 = vld [vmem:[%s8] sm:$0xff]
    %v1339 = vld [vmem:[%s8 + $0x8] sm:$0xff]
    %v1340 = vld [vmem:[%s8 + $0x10] sm:$0xff]
    %v1341 = vld [vmem:[%s8 + $0x18] sm:$0xff]
    %v1342 = vld [vmem:[%s8 + $0x20] sm:$0xff]
    %v1343 = vld [vmem:[%s8 + $0x28] sm:$0xff]
    %v1344 = vld [vmem:[%s8 + $0x30] sm:$0xff]
    %v1345 = vld [vmem:[%s8 + $0x38] sm:$0xff]
    %v1346 = vld [vmem:[%s8 + $0x40] sm:$0xff]
    %v1347 = vld [vmem:[%s8 + $0x48] sm:$0xff]
    %v1348 = vld [vmem:[%s8 + $0x50] sm:$0xff]
    %v1349 = vld [vmem:[%s8 + $0x58] sm:$0xff]
    %v1350 = vld [vmem:[%s8 + $0x60] sm:$0xff]
    %v1351 = vld [vmem:[%s8 + $0x68] sm:$0xff]
    %v1352 = vld [vmem:[%s8 + $0x70] sm:$0xff]
    %v1353 = vld [vmem:[%s8 + $0x78] sm:$0xff]
    %v1354 = vld [vmem:[%s8 + $0x80] sm:$0xff]
    %v1355 = vld [vmem:[%s8 + $0x88] sm:$0xff]
    %v1356 = vld [vmem:[%s8 + $0x90] sm:$0xff]
    %v1357 = vld [vmem:[%s8 + $0x98] sm:$0xff]
    %v1358 = vld [vmem:[%s8 + $0xa0] sm:$0xff]
    %v1359 = vld [vmem:[%s8 + $0xa8] sm:$0xff]
    %v1360 = vld [vmem:[%s8 + $0xb0] sm:$0xff]
    %v1361 = vld [vmem:[%s8 + $0xb8] sm:$0xff]
    %v1362 = vld [vmem:[%s8 + $0xc0] sm:$0xff]
    %v1363 = vld [vmem:[%s8 + $0xc8] sm:$0xff]
    %v1364 = vld [vmem:[%s8 + $0xd0] sm:$0xff]
    %v1365 = vld [vmem:[%s8 + $0xd8] sm:$0xff]
    %v1366 = vld [vmem:[%s8 + $0xe0] sm:$0xff]
    %v1367 = vld [vmem:[%s8 + $0xe8] sm:$0xff]
    %v1368 = vld [vmem:[%s8 + $0xf0] sm:$0xff]
    %v1369 = vld [vmem:[%s8 + $0xf8] sm:$0xff]
    %v1370 = vld [vmem:[%s9] sm:$0x1]
    %v1372 = vperm.slane %v1370, 0
    %1374 = vmatpush.msra.mxu0 %v1353
    %1375 = vmatpush.msra.mxu0 %v1352
    %1376 = vmatpush.msra.mxu0 %v1351
    %1377 = vmatpush.msra.mxu0 %v1350
    %1378 = vmatpush.msra.mxu0 %v1349
    %1379 = vmatpush.msra.mxu0 %v1348
    %1380 = vmatpush.msra.mxu0 %v1347
    %1381 = vmatpush.msra.mxu0 %v1346
    %1382 = vmatpush.msra.mxu0 %v1345
    %1383 = vmatpush.msra.mxu0 %v1344
    %1384 = vmatpush.msra.mxu0 %v1343
    %1385 = vmatpush.msra.mxu0 %v1342
    %1386 = vmatpush.msra.mxu0 %v1341
    %1387 = vmatpush.msra.mxu0 %v1340
    %1388 = vmatpush.msra.mxu0 %v1339
    %1389 = vmatpush.msra.mxu0 %v1338
    %1390 = vmatmul.f32.gmra.mxu0 %v1334
    %v1391 = vpop.f32.mrf.mxu0
    %v1392 = vadd.f32 %v1372, %v1391
    %1393 = vdwg.mxu0
    %1394 = vmatpush.msra.mxu0 %v1369
    %1395 = vmatpush.msra.mxu0 %v1368
    %1396 = vmatpush.msra.mxu0 %v1367
    %1397 = vmatpush.msra.mxu0 %v1366
    %1398 = vmatpush.msra.mxu0 %v1365
    %1399 = vmatpush.msra.mxu0 %v1364
    %1400 = vmatpush.msra.mxu0 %v1363
    %1401 = vmatpush.msra.mxu0 %v1362
    %1402 = vmatpush.msra.mxu0 %v1361
    %1403 = vmatpush.msra.mxu0 %v1360
    %1404 = vmatpush.msra.mxu0 %v1359
    %1405 = vmatpush.msra.mxu0 %v1358
    %1406 = vmatpush.msra.mxu0 %v1357
    %1407 = vmatpush.msra.mxu0 %v1356
    %1408 = vmatpush.msra.mxu0 %v1355
    %1409 = vmatpush.msra.mxu0 %v1354
    %1410 = vmatmul.f32.gmra.mxu0 %v1337
    %v1411 = vpop.f32.mrf.mxu0
    %v1412 = vadd.f32 %v1392, %v1411
    %1413 = vdwg.mxu0
    %vm1414 = vcmask 58368
    %1415 = vst.msk [vmem:[#allocation8] sm:$0x3] %vm1414, %v1412
    // Predicated region
    $region54: #{tpu_custom_call.1} parent=1 // pred_check
      _
    $region55: #{tpu_custom_call.1} parent=1 // pred_check_branch
      %1417 = sbr.rel (0) target = $region57
    $region56: #{tpu_custom_call.1} parent=1 // pred_region
      %1419 = vsyncadd [#allocation4], 0
      %s1421 = sshll.u32 [#allocation8], 4
      %s1422 = int_to_ptr.vmem [resolvable:$true] %s1421
      %s1423 = sshll.u32 %s10, 4
      %s1424 = int_to_ptr.hbm [resolvable:$true] %s1423
      %1426 = dma.vmem_to_hbm [thread:$0]  %s1422, 32, %s1424, [#allocation4]
    $region57: #{tpu_custom_call.1} parent=1 // pred_fallthru
      _
    // Predicated region
    $region58: #{tpu_custom_call.1} parent=1 // pred_check
      _
    $region59: #{tpu_custom_call.1} parent=1 // pred_check_branch
      %1428 = sbr.rel (0) target = $region61
    $region60: #{tpu_custom_call.1} parent=1 // pred_region
      %1430 = dma.done [#allocation4], 32
    $region61: #{tpu_custom_call.1} parent=1 // pred_fallthru
      _
    %1431 = vsyncpa [#allocation3], 1
    %1432 = vsyncpa [#allocation6], 1
    %1433 = vsyncpa [#allocation4], 1

</llo_original>
